<compile_context>
chip_gen: v7x
topology: tpu7x:2x2x1
jax: 0.10.0
libtpu: 0.0.40
codegen_flags: <defaults>
</compile_context>

<pallas_src>
import functools

import jax
import jax.numpy as jnp
from jax.experimental import pallas as pl
from jax.experimental.pallas import tpu as pltpu

LANE = 128


def _fused_graphsage_kernel(x_ref, a_ref, invdeg_ref,
                            wn1_ref, ws1_ref, b1_ref,
                            wn2_ref, ws2_ref, b2_ref,
                            wn3_ref, ws3_ref, b3_ref,
                            o_ref):
    """3 fused SAGEConv layers: A and the intermediate h never leave VMEM."""
    a = a_ref[...]              # (Np, Np) bf16, exact integer edge counts
    inv_deg = invdeg_ref[...]   # (Np, 1)  f32, 1/deg (0 for isolated/padded rows)
    h_bf = x_ref[...]           # (Np, 128) bf16

    def layer(h_bf, wn_ref, ws_ref, b_ref, apply_relu):
        # mean aggregation: counts matmul on the MXU, exact f32 rescale on the VPU
        agg = jnp.dot(a, h_bf, preferred_element_type=jnp.float32) * inv_deg
        # SAGEConv: lin_l(mean_agg) + lin_r(x) + bias  (two summed K=128 dots)
        out = (jnp.dot(agg.astype(jnp.bfloat16), wn_ref[...],
                       preferred_element_type=jnp.float32)
               + jnp.dot(h_bf, ws_ref[...],
                         preferred_element_type=jnp.float32)
               + b_ref[...])
        if apply_relu:
            out = jnp.maximum(out, 0.0)
        return out

    h1 = layer(h_bf, wn1_ref, ws1_ref, b1_ref, True)                       # conv1 + ReLU (+dropout=id)
    h2 = layer(h1.astype(jnp.bfloat16), wn2_ref, ws2_ref, b2_ref, True)    # conv2 + ReLU (+dropout=id)
    h3 = layer(h2.astype(jnp.bfloat16), wn3_ref, ws3_ref, b3_ref, False)   # conv3
    o_ref[...] = h3.astype(o_ref.dtype)


def _round_up(v, m):
    return (v + m - 1) // m * m


def _pad2d(x, rows, cols):
    return jnp.pad(x, ((0, rows - x.shape[0]), (0, cols - x.shape[1])))


def pack_params(params):
    """Zero-pad each (Fin,Fout) weight to (128,128) bf16; bias to (1,128) f32.

    Done ONCE per model (weights are static across forward calls).
    """
    packed = []
    for p in params:
        wn = _pad2d(p["w_neigh"], LANE, LANE).astype(jnp.bfloat16)
        ws = _pad2d(p["w_self"], LANE, LANE).astype(jnp.bfloat16)
        b = _pad2d(p["bias"].reshape(1, -1), 1, LANE).astype(jnp.float32)
        packed += [wn, ws, b]
    return packed


def build_adjacency_counts(edge_index, num_nodes):
    """Dense edge-count matrix + f32 inverse degree, from [2, E] edge_index.

    PyG 'source_to_target' flow: messages flow src=edge_index[0] -> dst=edge_index[1];
    each dst averages over incoming edges (scatter-mean). Isolated nodes get an
    all-zero aggregation. Counts (not 1/deg) are stored so the bf16 cast is exact.
    Built once per graph (hoisted out of the forward pass).
    """
    src, dst = edge_index[0], edge_index[1]
    a = jnp.zeros((num_nodes, num_nodes), jnp.float32)
    a = a.at[dst, src].add(1.0)
    deg = a.sum(axis=-1, keepdims=True)
    inv_deg = jnp.where(deg > 0, 1.0 / deg, 0.0)
    return a, inv_deg


@functools.partial(jax.jit, static_argnames=("out_channels",))
def graphsage_forward(packed_params, x, a_cnt, inv_deg, out_channels):
    """Fused 3-layer GraphSAGE forward (eval mode). a_cnt/inv_deg precomputed."""
    n = x.shape[0]
    n_pad = _round_up(max(n, LANE), LANE)               # lane-dense A (full MXU K tiles)

    x_p = _pad2d(x.astype(jnp.bfloat16), n_pad, LANE)   # (Np, 128) bf16
    a_p = _pad2d(a_cnt, n_pad, n_pad).astype(jnp.bfloat16)
    inv_p = jnp.pad(inv_deg.astype(jnp.float32), ((0, n_pad - n), (0, 0)))

    operands = [x_p, a_p, inv_p] + list(packed_params)

    def full_spec(arr):
        return pl.BlockSpec(arr.shape, lambda: (0, 0))

    out = pl.pallas_call(
        _fused_graphsage_kernel,
        out_shape=jax.ShapeDtypeStruct((n_pad, LANE), jnp.float32),
        in_specs=[full_spec(op) for op in operands],
        out_specs=pl.BlockSpec((n_pad, LANE), lambda: (0, 0)),
    )(*operands)

    return out[:n, :out_channels]


def init_params(key, in_channels, hidden_dim, out_channels):
    """Deterministic Glorot-ish init for the 3 SAGEConv layers."""
    dims = [
        (in_channels, hidden_dim),
        (hidden_dim, hidden_dim // 2),
        (hidden_dim // 2, out_channels),
    ]
    params = []
    for (fin, fout) in dims:
        key, k1, k2, k3 = jax.random.split(key, 4)
        scale = (2.0 / (fin + fout)) ** 0.5
        params.append(
            dict(
                w_neigh=scale * jax.random.normal(k1, (fin, fout), jnp.float32),
                w_self=scale * jax.random.normal(k2, (fin, fout), jnp.float32),
                bias=0.01 * jax.random.normal(k3, (fout,), jnp.float32),
            )
        )
    return params


if __name__ == "__main__":
    key = jax.random.PRNGKey(0)
    k_feat, k_edge, k_param = jax.random.split(key, 3)

    num_nodes = 16
    num_edges = 40
    in_channels = 8
    hidden_dim = 32
    out_channels = 4

    x = jax.random.normal(k_feat, (num_nodes, in_channels), jnp.float32)
    edge_index = jax.random.randint(k_edge, (2, num_edges), 0, num_nodes, jnp.int32)

    params = init_params(k_param, in_channels, hidden_dim, out_channels)
    packed = pack_params(params)                         # static: packed once

    # Adjacency counts + inverse degree built once per graph.
    a_cnt, inv_deg = build_adjacency_counts(edge_index, num_nodes)

    out = graphsage_forward(packed, x, a_cnt, inv_deg, out_channels=out_channels)
    out = jax.block_until_ready(out)

    assert out.shape == (num_nodes, out_channels), out.shape
    assert jnp.isfinite(out).all()
    print("KERNEL_OK")
</pallas_src>

<mosaic_0001>
module attributes {stable_mosaic.version = 11 : i64} {
  func.func @_fused_graphsage_kernel(%arg0: memref<128x128xbf16, #tpu.memory_space<vmem>>, %arg1: memref<128x128xbf16, #tpu.memory_space<vmem>>, %arg2: memref<128x1xf32, #tpu.memory_space<vmem>>, %arg3: memref<128x128xbf16, #tpu.memory_space<vmem>>, %arg4: memref<128x128xbf16, #tpu.memory_space<vmem>>, %arg5: memref<1x128xf32, #tpu.memory_space<vmem>>, %arg6: memref<128x128xbf16, #tpu.memory_space<vmem>>, %arg7: memref<128x128xbf16, #tpu.memory_space<vmem>>, %arg8: memref<1x128xf32, #tpu.memory_space<vmem>>, %arg9: memref<128x128xbf16, #tpu.memory_space<vmem>>, %arg10: memref<128x128xbf16, #tpu.memory_space<vmem>>, %arg11: memref<1x128xf32, #tpu.memory_space<vmem>>, %arg12: memref<128x128xf32, #tpu.memory_space<vmem>>) attributes {dimension_semantics = [], scalar_prefetch = 0 : i64, scratch_operands = 0 : i64, tpu.core_type = #tpu.core_type<tc>} {
    %c0 = arith.constant 0 : index
    %c0_0 = arith.constant 0 : index
    %0 = vector.load %arg1[%c0, %c0_0] : memref<128x128xbf16, #tpu.memory_space<vmem>>, vector<128x128xbf16>
    %c0_1 = arith.constant 0 : index
    %c0_2 = arith.constant 0 : index
    %1 = vector.load %arg2[%c0_1, %c0_2] : memref<128x1xf32, #tpu.memory_space<vmem>>, vector<128x1xf32>
    %c0_3 = arith.constant 0 : index
    %c0_4 = arith.constant 0 : index
    %2 = vector.load %arg0[%c0_3, %c0_4] : memref<128x128xbf16, #tpu.memory_space<vmem>>, vector<128x128xbf16>
    %cst = arith.constant dense<0.000000e+00> : vector<128x128xf32>
    %3 = tpu.matmul %0, %2, %cst {dimension_numbers = #tpu.dot_dimension_numbers<[1], [0], [0], [1], [0, 0, 1, 1], [], []>} : vector<128x128xbf16>, vector<128x128xbf16>, vector<128x128xf32> -> vector<128x128xf32>
    %4 = vector.broadcast %1 : vector<128x1xf32> to vector<128x128xf32>
    %5 = arith.mulf %3, %4 : vector<128x128xf32>
    %6 = arith.truncf %5 : vector<128x128xf32> to vector<128x128xbf16>
    %c0_5 = arith.constant 0 : index
    %c0_6 = arith.constant 0 : index
    %7 = vector.load %arg3[%c0_5, %c0_6] : memref<128x128xbf16, #tpu.memory_space<vmem>>, vector<128x128xbf16>
    %cst_7 = arith.constant dense<0.000000e+00> : vector<128x128xf32>
    %8 = tpu.matmul %6, %7, %cst_7 {dimension_numbers = #tpu.dot_dimension_numbers<[1], [0], [0], [1], [0, 0, 1, 1], [], []>} : vector<128x128xbf16>, vector<128x128xbf16>, vector<128x128xf32> -> vector<128x128xf32>
    %c0_8 = arith.constant 0 : index
    %c0_9 = arith.constant 0 : index
    %9 = vector.load %arg4[%c0_8, %c0_9] : memref<128x128xbf16, #tpu.memory_space<vmem>>, vector<128x128xbf16>
    %cst_10 = arith.constant dense<0.000000e+00> : vector<128x128xf32>
    %10 = tpu.matmul %2, %9, %cst_10 {dimension_numbers = #tpu.dot_dimension_numbers<[1], [0], [0], [1], [0, 0, 1, 1], [], []>} : vector<128x128xbf16>, vector<128x128xbf16>, vector<128x128xf32> -> vector<128x128xf32>
    %11 = arith.addf %8, %10 : vector<128x128xf32>
    %c0_11 = arith.constant 0 : index
    %c0_12 = arith.constant 0 : index
    %12 = vector.load %arg5[%c0_11, %c0_12] : memref<1x128xf32, #tpu.memory_space<vmem>>, vector<1x128xf32>
    %13 = vector.broadcast %12 : vector<1x128xf32> to vector<128x128xf32>
    %14 = arith.addf %11, %13 : vector<128x128xf32>
    %cst_13 = arith.constant 0.000000e+00 : f32
    %15 = vector.broadcast %cst_13 : f32 to vector<128x128xf32>
    %16 = arith.maximumf %14, %15 : vector<128x128xf32>
    %17 = arith.truncf %16 : vector<128x128xf32> to vector<128x128xbf16>
    %cst_14 = arith.constant dense<0.000000e+00> : vector<128x128xf32>
    %18 = tpu.matmul %0, %17, %cst_14 {dimension_numbers = #tpu.dot_dimension_numbers<[1], [0], [0], [1], [0, 0, 1, 1], [], []>} : vector<128x128xbf16>, vector<128x128xbf16>, vector<128x128xf32> -> vector<128x128xf32>
    %19 = vector.broadcast %1 : vector<128x1xf32> to vector<128x128xf32>
    %20 = arith.mulf %18, %19 : vector<128x128xf32>
    %21 = arith.truncf %20 : vector<128x128xf32> to vector<128x128xbf16>
    %c0_15 = arith.constant 0 : index
    %c0_16 = arith.constant 0 : index
    %22 = vector.load %arg6[%c0_15, %c0_16] : memref<128x128xbf16, #tpu.memory_space<vmem>>, vector<128x128xbf16>
    %cst_17 = arith.constant dense<0.000000e+00> : vector<128x128xf32>
    %23 = tpu.matmul %21, %22, %cst_17 {dimension_numbers = #tpu.dot_dimension_numbers<[1], [0], [0], [1], [0, 0, 1, 1], [], []>} : vector<128x128xbf16>, vector<128x128xbf16>, vector<128x128xf32> -> vector<128x128xf32>
    %c0_18 = arith.constant 0 : index
    %c0_19 = arith.constant 0 : index
    %24 = vector.load %arg7[%c0_18, %c0_19] : memref<128x128xbf16, #tpu.memory_space<vmem>>, vector<128x128xbf16>
    %cst_20 = arith.constant dense<0.000000e+00> : vector<128x128xf32>
    %25 = tpu.matmul %17, %24, %cst_20 {dimension_numbers = #tpu.dot_dimension_numbers<[1], [0], [0], [1], [0, 0, 1, 1], [], []>} : vector<128x128xbf16>, vector<128x128xbf16>, vector<128x128xf32> -> vector<128x128xf32>
    %26 = arith.addf %23, %25 : vector<128x128xf32>
    %c0_21 = arith.constant 0 : index
    %c0_22 = arith.constant 0 : index
    %27 = vector.load %arg8[%c0_21, %c0_22] : memref<1x128xf32, #tpu.memory_space<vmem>>, vector<1x128xf32>
    %28 = vector.broadcast %27 : vector<1x128xf32> to vector<128x128xf32>
    %29 = arith.addf %26, %28 : vector<128x128xf32>
    %cst_23 = arith.constant 0.000000e+00 : f32
    %30 = vector.broadcast %cst_23 : f32 to vector<128x128xf32>
    %31 = arith.maximumf %29, %30 : vector<128x128xf32>
    %32 = arith.truncf %31 : vector<128x128xf32> to vector<128x128xbf16>
    %cst_24 = arith.constant dense<0.000000e+00> : vector<128x128xf32>
    %33 = tpu.matmul %0, %32, %cst_24 {dimension_numbers = #tpu.dot_dimension_numbers<[1], [0], [0], [1], [0, 0, 1, 1], [], []>} : vector<128x128xbf16>, vector<128x128xbf16>, vector<128x128xf32> -> vector<128x128xf32>
    %34 = vector.broadcast %1 : vector<128x1xf32> to vector<128x128xf32>
    %35 = arith.mulf %33, %34 : vector<128x128xf32>
    %36 = arith.truncf %35 : vector<128x128xf32> to vector<128x128xbf16>
    %c0_25 = arith.constant 0 : index
    %c0_26 = arith.constant 0 : index
    %37 = vector.load %arg9[%c0_25, %c0_26] : memref<128x128xbf16, #tpu.memory_space<vmem>>, vector<128x128xbf16>
    %cst_27 = arith.constant dense<0.000000e+00> : vector<128x128xf32>
    %38 = tpu.matmul %36, %37, %cst_27 {dimension_numbers = #tpu.dot_dimension_numbers<[1], [0], [0], [1], [0, 0, 1, 1], [], []>} : vector<128x128xbf16>, vector<128x128xbf16>, vector<128x128xf32> -> vector<128x128xf32>
    %c0_28 = arith.constant 0 : index
    %c0_29 = arith.constant 0 : index
    %39 = vector.load %arg10[%c0_28, %c0_29] : memref<128x128xbf16, #tpu.memory_space<vmem>>, vector<128x128xbf16>
    %cst_30 = arith.constant dense<0.000000e+00> : vector<128x128xf32>
    %40 = tpu.matmul %32, %39, %cst_30 {dimension_numbers = #tpu.dot_dimension_numbers<[1], [0], [0], [1], [0, 0, 1, 1], [], []>} : vector<128x128xbf16>, vector<128x128xbf16>, vector<128x128xf32> -> vector<128x128xf32>
    %41 = arith.addf %38, %40 : vector<128x128xf32>
    %c0_31 = arith.constant 0 : index
    %c0_32 = arith.constant 0 : index
    %42 = vector.load %arg11[%c0_31, %c0_32] : memref<1x128xf32, #tpu.memory_space<vmem>>, vector<1x128xf32>
    %43 = vector.broadcast %42 : vector<1x128xf32> to vector<128x128xf32>
    %44 = arith.addf %41, %43 : vector<128x128xf32>
    %c0_33 = arith.constant 0 : index
    %c0_34 = arith.constant 0 : index
    %45 = vector.load %arg12[%c0_33, %c0_34] : memref<128x128xf32, #tpu.memory_space<vmem>>, vector<128x128xf32>
    tpu.vector_store %arg12[%c0_33, %c0_34], %44 {strides = array<i32>} : memref<128x128xf32, #tpu.memory_space<vmem>>, vector<128x128xf32>,
    return
  }
}

</mosaic_0001>

<llo_original>
// kernel: graphsage_forward.1
$region0: #{graphsage_forward.1}
  #allocation0 [shape = 'u32[]', space=smem, size = 0x4, offset = 0x4, fixed_abs, tag = 'smem constant byte address 0x4 - core index']
  #allocation1 [shape = 'u32[144,128]{1,0:T(1,128)}', space=vmem, size = 0x12000, scoped, tag = 'internal scratch']
  %s0 = inlined_call_operand.vmem [shape: bf16[128,128], index: 0, kind: input, shape index: {}]
  %s1 = inlined_call_operand.vmem [shape: bf16[128,128], index: 1, kind: input, shape index: {}]
  %s2 = inlined_call_operand.vmem [shape: f32[128,1], index: 2, kind: input, shape index: {}]
  %s3 = inlined_call_operand.vmem [shape: bf16[128,128], index: 3, kind: input, shape index: {}]
  %s4 = inlined_call_operand.vmem [shape: bf16[128,128], index: 4, kind: input, shape index: {}]
  %s5 = inlined_call_operand.vmem [shape: f32[1,128], index: 5, kind: input, shape index: {}]
  %s6 = inlined_call_operand.vmem [shape: bf16[128,128], index: 6, kind: input, shape index: {}]
  %s7 = inlined_call_operand.vmem [shape: bf16[128,128], index: 7, kind: input, shape index: {}]
  %s8 = inlined_call_operand.vmem [shape: f32[1,128], index: 8, kind: input, shape index: {}]
  %s9 = inlined_call_operand.vmem [shape: bf16[128,128], index: 9, kind: input, shape index: {}]
  %s10 = inlined_call_operand.hbm [shape: bf16[128,128], index: 10, kind: input, shape index: {}]
  %s11 = inlined_call_operand.vmem [shape: f32[1,128], index: 11, kind: input, shape index: {}]
  %s12 = inlined_call_operand.vmem [shape: f32[128,128], index: 12, kind: output, shape index: {}]
  %s13 = sld [smem:[#allocation0]]
  $region62: #{graphsage_forward.1} parent=0
    _
  %s15 = ssub.s32 1, %s13
  %s16 = scalar_select 0, %s15, %s13
  $region1: #{graphsage_forward.1} parent=0
    #allocation2 [shape = 'u8[32768]{0}', space=vmem, size = 0x8000, scoped, tag = 'input window, operand 10, single buffered']
    #allocation3 [shape = 's32[1]{0}', space=sflag, size = 0x4, scoped, tag = 'scoped memory for graphsage_forward.1']
    %17 = vsyncpa [#allocation3], 0
    // Predicated region
    $region2: #{graphsage_forward.1} parent=1 // pred_check
      _
    $region3: #{graphsage_forward.1} parent=1 // pred_check_branch
      %19 = sbr.rel (0) target = $region5
    $region4: #{graphsage_forward.1} parent=1 // pred_region
      _
    $region5: #{graphsage_forward.1} parent=1 // pred_fallthru
      _
    // Predicated region
    $region6: #{graphsage_forward.1} parent=1 // pred_check
      _
    $region7: #{graphsage_forward.1} parent=1 // pred_check_branch
      %21 = sbr.rel (0) target = $region9
    $region8: #{graphsage_forward.1} parent=1 // pred_region
      _
    $region9: #{graphsage_forward.1} parent=1 // pred_fallthru
      _
    // Predicated region
    $region10: #{graphsage_forward.1} parent=1 // pred_check
      _
    $region11: #{graphsage_forward.1} parent=1 // pred_check_branch
      %23 = sbr.rel (0) target = $region13
    $region12: #{graphsage_forward.1} parent=1 // pred_region
      _
    $region13: #{graphsage_forward.1} parent=1 // pred_fallthru
      _
    // Predicated region
    $region14: #{graphsage_forward.1} parent=1 // pred_check
      _
    $region15: #{graphsage_forward.1} parent=1 // pred_check_branch
      %25 = sbr.rel (0) target = $region17
    $region16: #{graphsage_forward.1} parent=1 // pred_region
      _
    $region17: #{graphsage_forward.1} parent=1 // pred_fallthru
      _
    // Predicated region
    $region18: #{graphsage_forward.1} parent=1 // pred_check
      _
    $region19: #{graphsage_forward.1} parent=1 // pred_check_branch
      %27 = sbr.rel (0) target = $region21
    $region20: #{graphsage_forward.1} parent=1 // pred_region
      _
    $region21: #{graphsage_forward.1} parent=1 // pred_fallthru
      _
    // Predicated region
    $region22: #{graphsage_forward.1} parent=1 // pred_check
      _
    $region23: #{graphsage_forward.1} parent=1 // pred_check_branch
      %29 = sbr.rel (0) target = $region25
    $region24: #{graphsage_forward.1} parent=1 // pred_region
      _
    $region25: #{graphsage_forward.1} parent=1 // pred_fallthru
      _
    // Predicated region
    $region26: #{graphsage_forward.1} parent=1 // pred_check
      _
    $region27: #{graphsage_forward.1} parent=1 // pred_check_branch
      %31 = sbr.rel (0) target = $region29
    $region28: #{graphsage_forward.1} parent=1 // pred_region
      _
    $region29: #{graphsage_forward.1} parent=1 // pred_fallthru
      _
    // Predicated region
    $region30: #{graphsage_forward.1} parent=1 // pred_check
      _
    $region31: #{graphsage_forward.1} parent=1 // pred_check_branch
      %33 = sbr.rel (0) target = $region33
    $region32: #{graphsage_forward.1} parent=1 // pred_region
      _
    $region33: #{graphsage_forward.1} parent=1 // pred_fallthru
      _
    // Predicated region
    $region34: #{graphsage_forward.1} parent=1 // pred_check
      _
    $region35: #{graphsage_forward.1} parent=1 // pred_check_branch
      %35 = sbr.rel (0) target = $region37
    $region36: #{graphsage_forward.1} parent=1 // pred_region
      _
    $region37: #{graphsage_forward.1} parent=1 // pred_fallthru
      _
    // Predicated region
    $region38: #{graphsage_forward.1} parent=1 // pred_check
      _
    $region39: #{graphsage_forward.1} parent=1 // pred_check_branch
      %37 = sbr.rel (0) target = $region41
    $region40: #{graphsage_forward.1} parent=1 // pred_region
      _
    $region41: #{graphsage_forward.1} parent=1 // pred_fallthru
      _
    // Predicated region
    $region42: #{graphsage_forward.1} parent=1 // pred_check
      _
    $region43: #{graphsage_forward.1} parent=1 // pred_check_branch
      %39 = sbr.rel (0) target = $region45
    $region44: #{graphsage_forward.1} parent=1 // pred_region
      %s41 = ssub.s32 1024, 1024
      %42 = vsyncadd [#allocation3], %s41
      %s43 = sshll.u32 [#allocation2], 4
      %s44 = int_to_ptr.vmem [resolvable:$true] %s43
      %49 = dma.hbm_to_vmem [thread:$0]  %s10, 1024, %s44, [#allocation3], 64, 64, 4
    $region45: #{graphsage_forward.1} parent=1 // pred_fallthru
      _
    // Predicated region
    $region46: #{graphsage_forward.1} parent=1 // pred_check
      _
    $region47: #{graphsage_forward.1} parent=1 // pred_check_branch
      %51 = sbr.rel (0) target = $region49
    $region48: #{graphsage_forward.1} parent=1 // pred_region
      _
    $region49: #{graphsage_forward.1} parent=1 // pred_fallthru
      _
    // Predicated region
    $region50: #{graphsage_forward.1} parent=1 // pred_check
      _
    $region51: #{graphsage_forward.1} parent=1 // pred_check_branch
      %53 = sbr.rel (0) target = $region53
    $region52: #{graphsage_forward.1} parent=1 // pred_region
      %54 = dma.done [#allocation3], 1024
    $region53: #{graphsage_forward.1} parent=1 // pred_fallthru
      _
    %v56 = vld [vmem:[%s1] sm:$0xf]
    %v57 = vld [vmem:[%s1 + $0x4] sm:$0xf]
    %v58 = vld [vmem:[%s1 + $0x8] sm:$0xf]
    %v59 = vld [vmem:[%s1 + $0xc] sm:$0xf]
    %v60 = vld [vmem:[%s1 + $0x10] sm:$0xf]
    %v61 = vld [vmem:[%s1 + $0x14] sm:$0xf]
    %v62 = vld [vmem:[%s1 + $0x18] sm:$0xf]
    %v63 = vld [vmem:[%s1 + $0x1c] sm:$0xf]
    %v64 = vld [vmem:[%s1 + $0x20] sm:$0xf]
    %v65 = vld [vmem:[%s1 + $0x24] sm:$0xf]
    %v66 = vld [vmem:[%s1 + $0x28] sm:$0xf]
    %v67 = vld [vmem:[%s1 + $0x2c] sm:$0xf]
    %v68 = vld [vmem:[%s1 + $0x30] sm:$0xf]
    %v69 = vld [vmem:[%s1 + $0x34] sm:$0xf]
    %v70 = vld [vmem:[%s1 + $0x38] sm:$0xf]
    %v71 = vld [vmem:[%s1 + $0x3c] sm:$0xf]
    %v72 = vld [vmem:[%s2] sm:$0xff]
    %v73 = vld [vmem:[%s2 + $0x8] sm:$0xff]
    %v74 = vld [vmem:[%s2 + $0x10] sm:$0xff]
    %v75 = vld [vmem:[%s2 + $0x18] sm:$0xff]
    %v76 = vld [vmem:[%s2 + $0x20] sm:$0xff]
    %v77 = vld [vmem:[%s2 + $0x28] sm:$0xff]
    %v78 = vld [vmem:[%s2 + $0x30] sm:$0xff]
    %v79 = vld [vmem:[%s2 + $0x38] sm:$0xff]
    %v80 = vld [vmem:[%s2 + $0x40] sm:$0xff]
    %v81 = vld [vmem:[%s2 + $0x48] sm:$0xff]
    %v82 = vld [vmem:[%s2 + $0x50] sm:$0xff]
    %v83 = vld [vmem:[%s2 + $0x58] sm:$0xff]
    %v84 = vld [vmem:[%s2 + $0x60] sm:$0xff]
    %v85 = vld [vmem:[%s2 + $0x68] sm:$0xff]
    %v86 = vld [vmem:[%s2 + $0x70] sm:$0xff]
    %v87 = vld [vmem:[%s2 + $0x78] sm:$0xff]
    %v88 = vld [vmem:[%s0] sm:$0xf]
    %v89 = vld [vmem:[%s0 + $0x4] sm:$0xf]
    %v90 = vld [vmem:[%s0 + $0x8] sm:$0xf]
    %v91 = vld [vmem:[%s0 + $0xc] sm:$0xf]
    %v92 = vld [vmem:[%s0 + $0x10] sm:$0xf]
    %v93 = vld [vmem:[%s0 + $0x14] sm:$0xf]
    %v94 = vld [vmem:[%s0 + $0x18] sm:$0xf]
    %v95 = vld [vmem:[%s0 + $0x1c] sm:$0xf]
    %v96 = vld [vmem:[%s0 + $0x20] sm:$0xf]
    %v97 = vld [vmem:[%s0 + $0x24] sm:$0xf]
    %v98 = vld [vmem:[%s0 + $0x28] sm:$0xf]
    %v99 = vld [vmem:[%s0 + $0x2c] sm:$0xf]
    %v100 = vld [vmem:[%s0 + $0x30] sm:$0xf]
    %v101 = vld [vmem:[%s0 + $0x34] sm:$0xf]
    %v102 = vld [vmem:[%s0 + $0x38] sm:$0xf]
    %v103 = vld [vmem:[%s0 + $0x3c] sm:$0xf]
    %v120 = vunpack.c.l.b16 %v56
    %v121 = vunpack.c.l.b16 %v57
    %v122 = vunpack.c.l.b16 %v58
    %v123 = vunpack.c.l.b16 %v59
    %v124 = vunpack.c.l.b16 %v60
    %v125 = vunpack.c.l.b16 %v61
    %v126 = vunpack.c.l.b16 %v62
    %v127 = vunpack.c.l.b16 %v63
    %v128 = vunpack.c.l.b16 %v64
    %v129 = vunpack.c.l.b16 %v65
    %v130 = vunpack.c.l.b16 %v66
    %v131 = vunpack.c.l.b16 %v67
    %v132 = vunpack.c.l.b16 %v68
    %v133 = vunpack.c.l.b16 %v69
    %v134 = vunpack.c.l.b16 %v70
    %v135 = vunpack.c.l.b16 %v71
    %v136 = vpack.c.b16 %v121, %v120
    %v137 = vpack.c.b16 %v123, %v122
    %v138 = vpack.c.b16 %v125, %v124
    %v139 = vpack.c.b16 %v127, %v126
    %v140 = vpack.c.b16 %v129, %v128
    %v141 = vpack.c.b16 %v131, %v130
    %v142 = vpack.c.b16 %v133, %v132
    %v143 = vpack.c.b16 %v135, %v134
    %v168 = vunpack.c.l.b16 %v88
    %v169 = vunpack.c.l.b16 %v89
    %v170 = vunpack.c.l.b16 %v90
    %v171 = vunpack.c.l.b16 %v91
    %v172 = vunpack.c.l.b16 %v92
    %v173 = vunpack.c.l.b16 %v93
    %v174 = vunpack.c.l.b16 %v94
    %v175 = vunpack.c.l.b16 %v95
    %v176 = vunpack.c.l.b16 %v96
    %v177 = vunpack.c.l.b16 %v97
    %v178 = vunpack.c.l.b16 %v98
    %v179 = vunpack.c.l.b16 %v99
    %v180 = vunpack.c.l.b16 %v100
    %v181 = vunpack.c.l.b16 %v101
    %v182 = vunpack.c.l.b16 %v102
    %v183 = vunpack.c.l.b16 %v103
    %v184 = vpack.c.b16 %v169, %v168
    %v185 = vpack.c.b16 %v171, %v170
    %v186 = vpack.c.b16 %v173, %v172
    %v187 = vpack.c.b16 %v175, %v174
    %v188 = vpack.c.b16 %v177, %v176
    %v189 = vpack.c.b16 %v179, %v178
    %v190 = vpack.c.b16 %v181, %v180
    %v191 = vpack.c.b16 %v183, %v182
    %200 = vmatprep.subr.bf16.mxu0 0
    %201 = vmatpush1.bf16.msra.mxu0 %v184
    %202 = vmatprep.subr.bf16.mxu0 0
    %203 = vmatpush1.bf16.msra.mxu0 %v185
    %204 = vmatprep.subr.bf16.mxu0 0
    %205 = vmatpush1.bf16.msra.mxu0 %v186
    %206 = vmatprep.subr.bf16.mxu0 0
    %207 = vmatpush1.bf16.msra.mxu0 %v187
    %208 = vmatprep.subr.bf16.mxu0 0
    %209 = vmatpush1.bf16.msra.mxu0 %v188
    %210 = vmatprep.subr.bf16.mxu0 0
    %211 = vmatpush1.bf16.msra.mxu0 %v189
    %212 = vmatprep.subr.bf16.mxu0 0
    %213 = vmatpush1.bf16.msra.mxu0 %v190
    %214 = vmatprep.subr.bf16.mxu0 0
    %215 = vmatpush1.bf16.msra.mxu0 %v191
    %216 = vmatprep.subr.bf16.mxu0 0
    %217 = vmatpush1.bf16.msra.mxu0 0
    %218 = vmatprep.subr.bf16.mxu0 0
    %219 = vmatpush1.bf16.msra.mxu0 0
    %220 = vmatprep.subr.bf16.mxu0 0
    %221 = vmatpush1.bf16.msra.mxu0 0
    %222 = vmatprep.subr.bf16.mxu0 0
    %223 = vmatpush1.bf16.msra.mxu0 0
    %224 = vmatprep.subr.bf16.mxu0 0
    %225 = vmatpush1.bf16.msra.mxu0 0
    %226 = vmatprep.subr.bf16.mxu0 0
    %227 = vmatpush1.bf16.msra.mxu0 0
    %228 = vmatprep.subr.bf16.mxu0 0
    %229 = vmatpush1.bf16.msra.mxu0 0
    %230 = vmatprep.subr.bf16.mxu0 0
    %231 = vmatpush1.bf16.msra.mxu0 0
    %232 = vmatprep.mubr.bf16.mxu0 0
    %233 = vmatmul.mubr.bf16.gmra.mrb[0].mxu0 %v136
    %v234 = vpop.f32.mrb[0].mxu0
    %v235 = vadd.f32 0.0, %v234
    %v236 = vpop.f32.mrb[0].mxu0
    %v237 = vpop.f32.mrb[0].mxu0
    %v238 = vadd.f32 0.0, %v237
    %v239 = vpop.f32.mrb[0].mxu0
    %240 = vmatprep.mubr.bf16.mxu0 0
    %241 = vmatmul.mubr.bf16.gmra.mrb[0].mxu0 %v137
    %v242 = vpop.f32.mrb[0].mxu0
    %v243 = vadd.f32 0.0, %v242
    %v244 = vpop.f32.mrb[0].mxu0
    %v245 = vpop.f32.mrb[0].mxu0
    %v246 = vadd.f32 0.0, %v245
    %v247 = vpop.f32.mrb[0].mxu0
    %248 = vmatprep.mubr.bf16.mxu0 0
    %249 = vmatmul.mubr.bf16.gmra.mrb[0].mxu0 %v138
    %v250 = vpop.f32.mrb[0].mxu0
    %v251 = vadd.f32 0.0, %v250
    %v252 = vpop.f32.mrb[0].mxu0
    %v253 = vpop.f32.mrb[0].mxu0
    %v254 = vadd.f32 0.0, %v253
    %v255 = vpop.f32.mrb[0].mxu0
    %256 = vmatprep.mubr.bf16.mxu0 0
    %257 = vmatmul.mubr.bf16.gmra.mrb[0].mxu0 %v139
    %v258 = vpop.f32.mrb[0].mxu0
    %v259 = vadd.f32 0.0, %v258
    %v260 = vpop.f32.mrb[0].mxu0
    %v261 = vpop.f32.mrb[0].mxu0
    %v262 = vadd.f32 0.0, %v261
    %v263 = vpop.f32.mrb[0].mxu0
    %264 = vmatprep.mubr.bf16.mxu0 0
    %265 = vmatmul.mubr.bf16.gmra.mrb[0].mxu0 %v140
    %v266 = vpop.f32.mrb[0].mxu0
    %v267 = vadd.f32 0.0, %v266
    %v268 = vpop.f32.mrb[0].mxu0
    %v269 = vpop.f32.mrb[0].mxu0
    %v270 = vadd.f32 0.0, %v269
    %v271 = vpop.f32.mrb[0].mxu0
    %272 = vmatprep.mubr.bf16.mxu0 0
    %273 = vmatmul.mubr.bf16.gmra.mrb[0].mxu0 %v141
    %v274 = vpop.f32.mrb[0].mxu0
    %v275 = vadd.f32 0.0, %v274
    %v276 = vpop.f32.mrb[0].mxu0
    %v277 = vpop.f32.mrb[0].mxu0
    %v278 = vadd.f32 0.0, %v277
    %v279 = vpop.f32.mrb[0].mxu0
    %280 = vmatprep.mubr.bf16.mxu0 0
    %281 = vmatmul.mubr.bf16.gmra.mrb[0].mxu0 %v142
    %v282 = vpop.f32.mrb[0].mxu0
    %v283 = vadd.f32 0.0, %v282
    %v284 = vpop.f32.mrb[0].mxu0
    %v285 = vpop.f32.mrb[0].mxu0
    %v286 = vadd.f32 0.0, %v285
    %v287 = vpop.f32.mrb[0].mxu0
    %288 = vmatprep.mubr.bf16.mxu0 0
    %289 = vmatmul.mubr.bf16.gmra.mrb[0].mxu0 %v143
    %v290 = vpop.f32.mrb[0].mxu0
    %v291 = vadd.f32 0.0, %v290
    %v292 = vpop.f32.mrb[0].mxu0
    %v293 = vpop.f32.mrb[0].mxu0
    %v294 = vadd.f32 0.0, %v293
    %v295 = vpop.f32.mrb[0].mxu0
    %296 = vdwg.mxu0
    %298 = vset.pattern.permute.xlu0 0
    %299 = vperm.xlu0 %298, %v72
    %v300 = vpop.permute.xlu0 %299
    %303 = vset.pattern.permute.xlu0 0
    %304 = vperm.xlu0 %303, %v73
    %v305 = vpop.permute.xlu0 %304
    %308 = vset.pattern.permute.xlu0 0
    %309 = vperm.xlu0 %308, %v74
    %v310 = vpop.permute.xlu0 %309
    %313 = vset.pattern.permute.xlu0 0
    %314 = vperm.xlu0 %313, %v75
    %v315 = vpop.permute.xlu0 %314
    %318 = vset.pattern.permute.xlu0 0
    %319 = vperm.xlu0 %318, %v76
    %v320 = vpop.permute.xlu0 %319
    %323 = vset.pattern.permute.xlu0 0
    %324 = vperm.xlu0 %323, %v77
    %v325 = vpop.permute.xlu0 %324
    %328 = vset.pattern.permute.xlu0 0
    %329 = vperm.xlu0 %328, %v78
    %v330 = vpop.permute.xlu0 %329
    %333 = vset.pattern.permute.xlu0 0
    %334 = vperm.xlu0 %333, %v79
    %v335 = vpop.permute.xlu0 %334
    %338 = vset.pattern.permute.xlu0 0
    %339 = vperm.xlu0 %338, %v80
    %v340 = vpop.permute.xlu0 %339
    %343 = vset.pattern.permute.xlu0 0
    %344 = vperm.xlu0 %343, %v81
    %v345 = vpop.permute.xlu0 %344
    %348 = vset.pattern.permute.xlu0 0
    %349 = vperm.xlu0 %348, %v82
    %v350 = vpop.permute.xlu0 %349
    %353 = vset.pattern.permute.xlu0 0
    %354 = vperm.xlu0 %353, %v83
    %v355 = vpop.permute.xlu0 %354
    %358 = vset.pattern.permute.xlu0 0
    %359 = vperm.xlu0 %358, %v84
    %v360 = vpop.permute.xlu0 %359
    %363 = vset.pattern.permute.xlu0 0
    %364 = vperm.xlu0 %363, %v85
    %v365 = vpop.permute.xlu0 %364
    %368 = vset.pattern.permute.xlu0 0
    %369 = vperm.xlu0 %368, %v86
    %v370 = vpop.permute.xlu0 %369
    %373 = vset.pattern.permute.xlu0 0
    %374 = vperm.xlu0 %373, %v87
    %v375 = vpop.permute.xlu0 %374
    %v377 = vmul.f32 %v235, %v300
    %v378 = vmul.f32 %v238, %v305
    %v379 = vmul.f32 %v243, %v310
    %v380 = vmul.f32 %v246, %v315
    %v381 = vmul.f32 %v251, %v320
    %v382 = vmul.f32 %v254, %v325
    %v383 = vmul.f32 %v259, %v330
    %v384 = vmul.f32 %v262, %v335
    %v385 = vmul.f32 %v267, %v340
    %v386 = vmul.f32 %v270, %v345
    %v387 = vmul.f32 %v275, %v350
    %v388 = vmul.f32 %v278, %v355
    %v389 = vmul.f32 %v283, %v360
    %v390 = vmul.f32 %v286, %v365
    %v391 = vmul.f32 %v291, %v370
    %v392 = vmul.f32 %v294, %v375
    %v393 = vpack.c.bf16 %v378, %v377
    %v394 = vpack.c.bf16 %v380, %v379
    %v395 = vpack.c.bf16 %v382, %v381
    %v396 = vpack.c.bf16 %v384, %v383
    %v397 = vpack.c.bf16 %v386, %v385
    %v398 = vpack.c.bf16 %v388, %v387
    %v399 = vpack.c.bf16 %v390, %v389
    %v400 = vpack.c.bf16 %v392, %v391
    %v401 = vld [vmem:[%s3] sm:$0xf]
    %v402 = vld [vmem:[%s3 + $0x4] sm:$0xf]
    %v403 = vld [vmem:[%s3 + $0x8] sm:$0xf]
    %v404 = vld [vmem:[%s3 + $0xc] sm:$0xf]
    %v405 = vld [vmem:[%s3 + $0x10] sm:$0xf]
    %v406 = vld [vmem:[%s3 + $0x14] sm:$0xf]
    %v407 = vld [vmem:[%s3 + $0x18] sm:$0xf]
    %v408 = vld [vmem:[%s3 + $0x1c] sm:$0xf]
    %v409 = vld [vmem:[%s3 + $0x20] sm:$0xf]
    %v410 = vld [vmem:[%s3 + $0x24] sm:$0xf]
    %v411 = vld [vmem:[%s3 + $0x28] sm:$0xf]
    %v412 = vld [vmem:[%s3 + $0x2c] sm:$0xf]
    %v413 = vld [vmem:[%s3 + $0x30] sm:$0xf]
    %v414 = vld [vmem:[%s3 + $0x34] sm:$0xf]
    %v415 = vld [vmem:[%s3 + $0x38] sm:$0xf]
    %v416 = vld [vmem:[%s3 + $0x3c] sm:$0xf]
    %v417 = vld [vmem:[%s4] sm:$0xf]
    %v418 = vld [vmem:[%s4 + $0x4] sm:$0xf]
    %v419 = vld [vmem:[%s4 + $0x8] sm:$0xf]
    %v420 = vld [vmem:[%s4 + $0xc] sm:$0xf]
    %v421 = vld [vmem:[%s4 + $0x10] sm:$0xf]
    %v422 = vld [vmem:[%s4 + $0x14] sm:$0xf]
    %v423 = vld [vmem:[%s4 + $0x18] sm:$0xf]
    %v424 = vld [vmem:[%s4 + $0x1c] sm:$0xf]
    %v425 = vld [vmem:[%s4 + $0x20] sm:$0xf]
    %v426 = vld [vmem:[%s4 + $0x24] sm:$0xf]
    %v427 = vld [vmem:[%s4 + $0x28] sm:$0xf]
    %v428 = vld [vmem:[%s4 + $0x2c] sm:$0xf]
    %v429 = vld [vmem:[%s4 + $0x30] sm:$0xf]
    %v430 = vld [vmem:[%s4 + $0x34] sm:$0xf]
    %v431 = vld [vmem:[%s4 + $0x38] sm:$0xf]
    %v432 = vld [vmem:[%s4 + $0x3c] sm:$0xf]
    %v449 = vunpack.c.l.b16 %v417
    %v450 = vunpack.c.l.b16 %v418
    %v451 = vunpack.c.l.b16 %v419
    %v452 = vunpack.c.l.b16 %v420
    %v453 = vunpack.c.l.b16 %v421
    %v454 = vunpack.c.l.b16 %v422
    %v455 = vunpack.c.l.b16 %v423
    %v456 = vunpack.c.l.b16 %v424
    %v457 = vunpack.c.l.b16 %v425
    %v458 = vunpack.c.l.b16 %v426
    %v459 = vunpack.c.l.b16 %v427
    %v460 = vunpack.c.l.b16 %v428
    %v461 = vunpack.c.l.b16 %v429
    %v462 = vunpack.c.l.b16 %v430
    %v463 = vunpack.c.l.b16 %v431
    %v464 = vunpack.c.l.b16 %v432
    %v465 = vpack.c.b16 %v450, %v449
    %v466 = vpack.c.b16 %v452, %v451
    %v467 = vpack.c.b16 %v454, %v453
    %v468 = vpack.c.b16 %v456, %v455
    %v469 = vpack.c.b16 %v458, %v457
    %v470 = vpack.c.b16 %v460, %v459
    %v471 = vpack.c.b16 %v462, %v461
    %v472 = vpack.c.b16 %v464, %v463
    %481 = vmatprep.subr.bf16.mxu0 0
    %482 = vmatpush1.bf16.msra.mxu0 %v465
    %483 = vmatprep.subr.bf16.mxu0 0
    %484 = vmatpush1.bf16.msra.mxu0 %v466
    %485 = vmatprep.subr.bf16.mxu0 0
    %486 = vmatpush1.bf16.msra.mxu0 %v467
    %487 = vmatprep.subr.bf16.mxu0 0
    %488 = vmatpush1.bf16.msra.mxu0 %v468
    %489 = vmatprep.subr.bf16.mxu0 0
    %490 = vmatpush1.bf16.msra.mxu0 %v469
    %491 = vmatprep.subr.bf16.mxu0 0
    %492 = vmatpush1.bf16.msra.mxu0 %v470
    %493 = vmatprep.subr.bf16.mxu0 0
    %494 = vmatpush1.bf16.msra.mxu0 %v471
    %495 = vmatprep.subr.bf16.mxu0 0
    %496 = vmatpush1.bf16.msra.mxu0 %v472
    %497 = vmatprep.subr.bf16.mxu0 0
    %498 = vmatpush1.bf16.msra.mxu0 0
    %499 = vmatprep.subr.bf16.mxu0 0
    %500 = vmatpush1.bf16.msra.mxu0 0
    %501 = vmatprep.subr.bf16.mxu0 0
    %502 = vmatpush1.bf16.msra.mxu0 0
    %503 = vmatprep.subr.bf16.mxu0 0
    %504 = vmatpush1.bf16.msra.mxu0 0
    %505 = vmatprep.subr.bf16.mxu0 0
    %506 = vmatpush1.bf16.msra.mxu0 0
    %507 = vmatprep.subr.bf16.mxu0 0
    %508 = vmatpush1.bf16.msra.mxu0 0
    %509 = vmatprep.subr.bf16.mxu0 0
    %510 = vmatpush1.bf16.msra.mxu0 0
    %511 = vmatprep.subr.bf16.mxu0 0
    %512 = vmatpush1.bf16.msra.mxu0 0
    %513 = vmatprep.mubr.bf16.mxu0 0
    %514 = vmatmul.mubr.bf16.gmra.mrb[0].mxu0 %v184
    %v515 = vpop.f32.mrb[0].mxu0
    %v516 = vadd.f32 0.0, %v515
    %v517 = vpop.f32.mrb[0].mxu0
    %v518 = vpop.f32.mrb[0].mxu0
    %v519 = vadd.f32 0.0, %v518
    %v520 = vpop.f32.mrb[0].mxu0
    %521 = vmatprep.mubr.bf16.mxu0 0
    %522 = vmatmul.mubr.bf16.gmra.mrb[0].mxu0 %v185
    %v523 = vpop.f32.mrb[0].mxu0
    %v524 = vadd.f32 0.0, %v523
    %v525 = vpop.f32.mrb[0].mxu0
    %v526 = vpop.f32.mrb[0].mxu0
    %v527 = vadd.f32 0.0, %v526
    %v528 = vpop.f32.mrb[0].mxu0
    %529 = vmatprep.mubr.bf16.mxu0 0
    %530 = vmatmul.mubr.bf16.gmra.mrb[0].mxu0 %v186
    %v531 = vpop.f32.mrb[0].mxu0
    %v532 = vadd.f32 0.0, %v531
    %v533 = vpop.f32.mrb[0].mxu0
    %v534 = vpop.f32.mrb[0].mxu0
    %v535 = vadd.f32 0.0, %v534
    %v536 = vpop.f32.mrb[0].mxu0
    %537 = vmatprep.mubr.bf16.mxu0 0
    %538 = vmatmul.mubr.bf16.gmra.mrb[0].mxu0 %v187
    %v539 = vpop.f32.mrb[0].mxu0
    %v540 = vadd.f32 0.0, %v539
    %v541 = vpop.f32.mrb[0].mxu0
    %v542 = vpop.f32.mrb[0].mxu0
    %v543 = vadd.f32 0.0, %v542
    %v544 = vpop.f32.mrb[0].mxu0
    %545 = vmatprep.mubr.bf16.mxu0 0
    %546 = vmatmul.mubr.bf16.gmra.mrb[0].mxu0 %v188
    %v547 = vpop.f32.mrb[0].mxu0
    %v548 = vadd.f32 0.0, %v547
    %v549 = vpop.f32.mrb[0].mxu0
    %v550 = vpop.f32.mrb[0].mxu0
    %v551 = vadd.f32 0.0, %v550
    %v552 = vpop.f32.mrb[0].mxu0
    %553 = vmatprep.mubr.bf16.mxu0 0
    %554 = vmatmul.mubr.bf16.gmra.mrb[0].mxu0 %v189
    %v555 = vpop.f32.mrb[0].mxu0
    %v556 = vadd.f32 0.0, %v555
    %v557 = vpop.f32.mrb[0].mxu0
    %v558 = vpop.f32.mrb[0].mxu0
    %v559 = vadd.f32 0.0, %v558
    %v560 = vpop.f32.mrb[0].mxu0
    %561 = vmatprep.mubr.bf16.mxu0 0
    %562 = vmatmul.mubr.bf16.gmra.mrb[0].mxu0 %v190
    %v563 = vpop.f32.mrb[0].mxu0
    %v564 = vadd.f32 0.0, %v563
    %v565 = vpop.f32.mrb[0].mxu0
    %v566 = vpop.f32.mrb[0].mxu0
    %v567 = vadd.f32 0.0, %v566
    %v568 = vpop.f32.mrb[0].mxu0
    %569 = vmatprep.mubr.bf16.mxu0 0
    %570 = vmatmul.mubr.bf16.gmra.mrb[0].mxu0 %v191
    %v571 = vpop.f32.mrb[0].mxu0
    %v572 = vadd.f32 0.0, %v571
    %v573 = vpop.f32.mrb[0].mxu0
    %v574 = vpop.f32.mrb[0].mxu0
    %v575 = vadd.f32 0.0, %v574
    %v576 = vpop.f32.mrb[0].mxu0
    %577 = vdwg.mxu0
    %v594 = vunpack.c.l.b16 %v401
    %v595 = vunpack.c.l.b16 %v402
    %v596 = vunpack.c.l.b16 %v403
    %v597 = vunpack.c.l.b16 %v404
    %v598 = vunpack.c.l.b16 %v405
    %v599 = vunpack.c.l.b16 %v406
    %v600 = vunpack.c.l.b16 %v407
    %v601 = vunpack.c.l.b16 %v408
    %v602 = vunpack.c.l.b16 %v409
    %v603 = vunpack.c.l.b16 %v410
    %v604 = vunpack.c.l.b16 %v411
    %v605 = vunpack.c.l.b16 %v412
    %v606 = vunpack.c.l.b16 %v413
    %v607 = vunpack.c.l.b16 %v414
    %v608 = vunpack.c.l.b16 %v415
    %v609 = vunpack.c.l.b16 %v416
    %v610 = vpack.c.b16 %v595, %v594
    %v611 = vpack.c.b16 %v597, %v596
    %v612 = vpack.c.b16 %v599, %v598
    %v613 = vpack.c.b16 %v601, %v600
    %v614 = vpack.c.b16 %v603, %v602
    %v615 = vpack.c.b16 %v605, %v604
    %v616 = vpack.c.b16 %v607, %v606
    %v617 = vpack.c.b16 %v609, %v608
    %626 = vmatprep.subr.bf16.mxu0 0
    %627 = vmatpush1.bf16.msra.mxu0 %v610
    %628 = vmatprep.subr.bf16.mxu0 0
    %629 = vmatpush1.bf16.msra.mxu0 %v611
    %630 = vmatprep.subr.bf16.mxu0 0
    %631 = vmatpush1.bf16.msra.mxu0 %v612
    %632 = vmatprep.subr.bf16.mxu0 0
    %633 = vmatpush1.bf16.msra.mxu0 %v613
    %634 = vmatprep.subr.bf16.mxu0 0
    %635 = vmatpush1.bf16.msra.mxu0 %v614
    %636 = vmatprep.subr.bf16.mxu0 0
    %637 = vmatpush1.bf16.msra.mxu0 %v615
    %638 = vmatprep.subr.bf16.mxu0 0
    %639 = vmatpush1.bf16.msra.mxu0 %v616
    %640 = vmatprep.subr.bf16.mxu0 0
    %641 = vmatpush1.bf16.msra.mxu0 %v617
    %642 = vmatprep.subr.bf16.mxu0 0
    %643 = vmatpush1.bf16.msra.mxu0 0
    %644 = vmatprep.subr.bf16.mxu0 0
    %645 = vmatpush1.bf16.msra.mxu0 0
    %646 = vmatprep.subr.bf16.mxu0 0
    %647 = vmatpush1.bf16.msra.mxu0 0
    %648 = vmatprep.subr.bf16.mxu0 0
    %649 = vmatpush1.bf16.msra.mxu0 0
    %650 = vmatprep.subr.bf16.mxu0 0
    %651 = vmatpush1.bf16.msra.mxu0 0
    %652 = vmatprep.subr.bf16.mxu0 0
    %653 = vmatpush1.bf16.msra.mxu0 0
    %654 = vmatprep.subr.bf16.mxu0 0
    %655 = vmatpush1.bf16.msra.mxu0 0
    %656 = vmatprep.subr.bf16.mxu0 0
    %657 = vmatpush1.bf16.msra.mxu0 0
    %658 = vmatprep.mubr.bf16.mxu0 0
    %659 = vmatmul.mubr.bf16.gmra.mrb[0].mxu0 %v393
    %v660 = vpop.f32.mrb[0].mxu0
    %v661 = vadd.f32 %v516, %v660
    %v662 = vpop.f32.mrb[0].mxu0
    %v663 = vpop.f32.mrb[0].mxu0
    %v664 = vadd.f32 %v519, %v663
    %v665 = vpop.f32.mrb[0].mxu0
    %666 = vmatprep.mubr.bf16.mxu0 0
    %667 = vmatmul.mubr.bf16.gmra.mrb[0].mxu0 %v394
    %v668 = vpop.f32.mrb[0].mxu0
    %v669 = vadd.f32 %v524, %v668
    %v670 = vpop.f32.mrb[0].mxu0
    %v671 = vpop.f32.mrb[0].mxu0
    %v672 = vadd.f32 %v527, %v671
    %v673 = vpop.f32.mrb[0].mxu0
    %674 = vmatprep.mubr.bf16.mxu0 0
    %675 = vmatmul.mubr.bf16.gmra.mrb[0].mxu0 %v395
    %v676 = vpop.f32.mrb[0].mxu0
    %v677 = vadd.f32 %v532, %v676
    %v678 = vpop.f32.mrb[0].mxu0
    %v679 = vpop.f32.mrb[0].mxu0
    %v680 = vadd.f32 %v535, %v679
    %v681 = vpop.f32.mrb[0].mxu0
    %682 = vmatprep.mubr.bf16.mxu0 0
    %683 = vmatmul.mubr.bf16.gmra.mrb[0].mxu0 %v396
    %v684 = vpop.f32.mrb[0].mxu0
    %v685 = vadd.f32 %v540, %v684
    %v686 = vpop.f32.mrb[0].mxu0
    %v687 = vpop.f32.mrb[0].mxu0
    %v688 = vadd.f32 %v543, %v687
    %v689 = vpop.f32.mrb[0].mxu0
    %690 = vmatprep.mubr.bf16.mxu0 0
    %691 = vmatmul.mubr.bf16.gmra.mrb[0].mxu0 %v397
    %v692 = vpop.f32.mrb[0].mxu0
    %v693 = vadd.f32 %v548, %v692
    %v694 = vpop.f32.mrb[0].mxu0
    %v695 = vpop.f32.mrb[0].mxu0
    %v696 = vadd.f32 %v551, %v695
    %v697 = vpop.f32.mrb[0].mxu0
    %698 = vmatprep.mubr.bf16.mxu0 0
    %699 = vmatmul.mubr.bf16.gmra.mrb[0].mxu0 %v398
    %v700 = vpop.f32.mrb[0].mxu0
    %v701 = vadd.f32 %v556, %v700
    %v702 = vpop.f32.mrb[0].mxu0
    %v703 = vpop.f32.mrb[0].mxu0
    %v704 = vadd.f32 %v559, %v703
    %v705 = vpop.f32.mrb[0].mxu0
    %706 = vmatprep.mubr.bf16.mxu0 0
    %707 = vmatmul.mubr.bf16.gmra.mrb[0].mxu0 %v399
    %v708 = vpop.f32.mrb[0].mxu0
    %v709 = vadd.f32 %v564, %v708
    %v710 = vpop.f32.mrb[0].mxu0
    %v711 = vpop.f32.mrb[0].mxu0
    %v712 = vadd.f32 %v567, %v711
    %v713 = vpop.f32.mrb[0].mxu0
    %714 = vmatprep.mubr.bf16.mxu0 0
    %715 = vmatmul.mubr.bf16.gmra.mrb[0].mxu0 %v400
    %v716 = vpop.f32.mrb[0].mxu0
    %v717 = vadd.f32 %v572, %v716
    %v718 = vpop.f32.mrb[0].mxu0
    %v719 = vpop.f32.mrb[0].mxu0
    %v720 = vadd.f32 %v575, %v719
    %v721 = vpop.f32.mrb[0].mxu0
    %722 = vdwg.mxu0
    %v723 = vld [vmem:[%s5] sm:$0x1]
    %v725 = vlaneseq
    %v726 = vshrl.u32 %v725, 7
    %v727 = vsub.s32 0, %v726
    %v728 = vrot.slane %v723, %v727
    %v730 = vadd.f32 %v661, %v728
    %v731 = vadd.f32 %v664, %v728
    %v732 = vadd.f32 %v669, %v728
    %v733 = vadd.f32 %v672, %v728
    %v734 = vadd.f32 %v677, %v728
    %v735 = vadd.f32 %v680, %v728
    %v736 = vadd.f32 %v685, %v728
    %v737 = vadd.f32 %v688, %v728
    %v738 = vadd.f32 %v693, %v728
    %v739 = vadd.f32 %v696, %v728
    %v740 = vadd.f32 %v701, %v728
    %v741 = vadd.f32 %v704, %v728
    %v742 = vadd.f32 %v709, %v728
    %v743 = vadd.f32 %v712, %v728
    %v744 = vadd.f32 %v717, %v728
    %v745 = vadd.f32 %v720, %v728
    %v746 = vmax.f32 %v730, 0.0
    %v747 = vmax.f32 %v731, 0.0
    %v748 = vmax.f32 %v732, 0.0
    %v749 = vmax.f32 %v733, 0.0
    %v750 = vmax.f32 %v734, 0.0
    %v751 = vmax.f32 %v735, 0.0
    %v752 = vmax.f32 %v736, 0.0
    %v753 = vmax.f32 %v737, 0.0
    %v754 = vmax.f32 %v738, 0.0
    %v755 = vmax.f32 %v739, 0.0
    %v756 = vmax.f32 %v740, 0.0
    %v757 = vmax.f32 %v741, 0.0
    %v758 = vmax.f32 %v742, 0.0
    %v759 = vmax.f32 %v743, 0.0
    %v760 = vmax.f32 %v744, 0.0
    %v761 = vmax.f32 %v745, 0.0
    %v762 = vpack.c.bf16 %v747, %v746
    %v763 = vpack.c.bf16 %v749, %v748
    %v764 = vpack.c.bf16 %v751, %v750
    %v765 = vpack.c.bf16 %v753, %v752
    %v766 = vpack.c.bf16 %v755, %v754
    %v767 = vpack.c.bf16 %v757, %v756
    %v768 = vpack.c.bf16 %v759, %v758
    %v769 = vpack.c.bf16 %v761, %v760
    %770 = vmatprep.subr.bf16.mxu0 0
    %771 = vmatpush1.bf16.msra.mxu0 %v762
    %772 = vmatprep.subr.bf16.mxu0 0
    %773 = vmatpush1.bf16.msra.mxu0 %v763
    %774 = vmatprep.subr.bf16.mxu0 0
    %775 = vmatpush1.bf16.msra.mxu0 %v764
    %776 = vmatprep.subr.bf16.mxu0 0
    %777 = vmatpush1.bf16.msra.mxu0 %v765
    %778 = vmatprep.subr.bf16.mxu0 0
    %779 = vmatpush1.bf16.msra.mxu0 %v766
    %780 = vmatprep.subr.bf16.mxu0 0
    %781 = vmatpush1.bf16.msra.mxu0 %v767
    %782 = vmatprep.subr.bf16.mxu0 0
    %783 = vmatpush1.bf16.msra.mxu0 %v768
    %784 = vmatprep.subr.bf16.mxu0 0
    %785 = vmatpush1.bf16.msra.mxu0 %v769
    %786 = vmatprep.subr.bf16.mxu0 0
    %787 = vmatpush1.bf16.msra.mxu0 0
    %788 = vmatprep.subr.bf16.mxu0 0
    %789 = vmatpush1.bf16.msra.mxu0 0
    %790 = vmatprep.subr.bf16.mxu0 0
    %791 = vmatpush1.bf16.msra.mxu0 0
    %792 = vmatprep.subr.bf16.mxu0 0
    %793 = vmatpush1.bf16.msra.mxu0 0
    %794 = vmatprep.subr.bf16.mxu0 0
    %795 = vmatpush1.bf16.msra.mxu0 0
    %796 = vmatprep.subr.bf16.mxu0 0
    %797 = vmatpush1.bf16.msra.mxu0 0
    %798 = vmatprep.subr.bf16.mxu0 0
    %799 = vmatpush1.bf16.msra.mxu0 0
    %800 = vmatprep.subr.bf16.mxu0 0
    %801 = vmatpush1.bf16.msra.mxu0 0
    %802 = vmatprep.mubr.bf16.mxu0 0
    %803 = vmatmul.mubr.bf16.gmra.mrb[0].mxu0 %v136
    %v804 = vpop.f32.mrb[0].mxu0
    %v805 = vadd.f32 0.0, %v804
    %v806 = vpop.f32.mrb[0].mxu0
    %v807 = vpop.f32.mrb[0].mxu0
    %v808 = vadd.f32 0.0, %v807
    %v809 = vpop.f32.mrb[0].mxu0
    %810 = vmatprep.mubr.bf16.mxu0 0
    %811 = vmatmul.mubr.bf16.gmra.mrb[0].mxu0 %v137
    %v812 = vpop.f32.mrb[0].mxu0
    %v813 = vadd.f32 0.0, %v812
    %v814 = vpop.f32.mrb[0].mxu0
    %v815 = vpop.f32.mrb[0].mxu0
    %v816 = vadd.f32 0.0, %v815
    %v817 = vpop.f32.mrb[0].mxu0
    %818 = vmatprep.mubr.bf16.mxu0 0
    %819 = vmatmul.mubr.bf16.gmra.mrb[0].mxu0 %v138
    %v820 = vpop.f32.mrb[0].mxu0
    %v821 = vadd.f32 0.0, %v820
    %v822 = vpop.f32.mrb[0].mxu0
    %v823 = vpop.f32.mrb[0].mxu0
    %v824 = vadd.f32 0.0, %v823
    %v825 = vpop.f32.mrb[0].mxu0
    %826 = vmatprep.mubr.bf16.mxu0 0
    %827 = vmatmul.mubr.bf16.gmra.mrb[0].mxu0 %v139
    %v828 = vpop.f32.mrb[0].mxu0
    %v829 = vadd.f32 0.0, %v828
    %v830 = vpop.f32.mrb[0].mxu0
    %v831 = vpop.f32.mrb[0].mxu0
    %v832 = vadd.f32 0.0, %v831
    %v833 = vpop.f32.mrb[0].mxu0
    %834 = vmatprep.mubr.bf16.mxu0 0
    %835 = vmatmul.mubr.bf16.gmra.mrb[0].mxu0 %v140
    %v836 = vpop.f32.mrb[0].mxu0
    %v837 = vadd.f32 0.0, %v836
    %v838 = vpop.f32.mrb[0].mxu0
    %v839 = vpop.f32.mrb[0].mxu0
    %v840 = vadd.f32 0.0, %v839
    %v841 = vpop.f32.mrb[0].mxu0
    %842 = vmatprep.mubr.bf16.mxu0 0
    %843 = vmatmul.mubr.bf16.gmra.mrb[0].mxu0 %v141
    %v844 = vpop.f32.mrb[0].mxu0
    %v845 = vadd.f32 0.0, %v844
    %v846 = vpop.f32.mrb[0].mxu0
    %v847 = vpop.f32.mrb[0].mxu0
    %v848 = vadd.f32 0.0, %v847
    %v849 = vpop.f32.mrb[0].mxu0
    %850 = vmatprep.mubr.bf16.mxu0 0
    %851 = vmatmul.mubr.bf16.gmra.mrb[0].mxu0 %v142
    %v852 = vpop.f32.mrb[0].mxu0
    %v853 = vadd.f32 0.0, %v852
    %v854 = vpop.f32.mrb[0].mxu0
    %v855 = vpop.f32.mrb[0].mxu0
    %v856 = vadd.f32 0.0, %v855
    %v857 = vpop.f32.mrb[0].mxu0
    %858 = vmatprep.mubr.bf16.mxu0 0
    %859 = vmatmul.mubr.bf16.gmra.mrb[0].mxu0 %v143
    %v860 = vpop.f32.mrb[0].mxu0
    %v861 = vadd.f32 0.0, %v860
    %v862 = vpop.f32.mrb[0].mxu0
    %v863 = vpop.f32.mrb[0].mxu0
    %v864 = vadd.f32 0.0, %v863
    %v865 = vpop.f32.mrb[0].mxu0
    %866 = vdwg.mxu0
    %v867 = vmul.f32 %v805, %v300
    %v868 = vmul.f32 %v808, %v305
    %v869 = vmul.f32 %v813, %v310
    %v870 = vmul.f32 %v816, %v315
    %v871 = vmul.f32 %v821, %v320
    %v872 = vmul.f32 %v824, %v325
    %v873 = vmul.f32 %v829, %v330
    %v874 = vmul.f32 %v832, %v335
    %v875 = vmul.f32 %v837, %v340
    %v876 = vmul.f32 %v840, %v345
    %v877 = vmul.f32 %v845, %v350
    %v878 = vmul.f32 %v848, %v355
    %v879 = vmul.f32 %v853, %v360
    %v880 = vmul.f32 %v856, %v365
    %v881 = vmul.f32 %v861, %v370
    %v882 = vmul.f32 %v864, %v375
    %v883 = vpack.c.bf16 %v868, %v867
    %v884 = vpack.c.bf16 %v870, %v869
    %v885 = vpack.c.bf16 %v872, %v871
    %v886 = vpack.c.bf16 %v874, %v873
    %v887 = vpack.c.bf16 %v876, %v875
    %v888 = vpack.c.bf16 %v878, %v877
    %v889 = vpack.c.bf16 %v880, %v879
    %v890 = vpack.c.bf16 %v882, %v881
    %v891 = vld [vmem:[%s6] sm:$0xf]
    %v892 = vld [vmem:[%s6 + $0x4] sm:$0xf]
    %v893 = vld [vmem:[%s6 + $0x8] sm:$0xf]
    %v894 = vld [vmem:[%s6 + $0xc] sm:$0xf]
    %v895 = vld [vmem:[%s6 + $0x10] sm:$0xf]
    %v896 = vld [vmem:[%s6 + $0x14] sm:$0xf]
    %v897 = vld [vmem:[%s6 + $0x18] sm:$0xf]
    %v898 = vld [vmem:[%s6 + $0x1c] sm:$0xf]
    %v899 = vld [vmem:[%s6 + $0x20] sm:$0xf]
    %v900 = vld [vmem:[%s6 + $0x24] sm:$0xf]
    %v901 = vld [vmem:[%s6 + $0x28] sm:$0xf]
    %v902 = vld [vmem:[%s6 + $0x2c] sm:$0xf]
    %v903 = vld [vmem:[%s6 + $0x30] sm:$0xf]
    %v904 = vld [vmem:[%s6 + $0x34] sm:$0xf]
    %v905 = vld [vmem:[%s6 + $0x38] sm:$0xf]
    %v906 = vld [vmem:[%s6 + $0x3c] sm:$0xf]
    %v907 = vld [vmem:[%s7] sm:$0xf]
    %v908 = vld [vmem:[%s7 + $0x4] sm:$0xf]
    %v909 = vld [vmem:[%s7 + $0x8] sm:$0xf]
    %v910 = vld [vmem:[%s7 + $0xc] sm:$0xf]
    %v911 = vld [vmem:[%s7 + $0x10] sm:$0xf]
    %v912 = vld [vmem:[%s7 + $0x14] sm:$0xf]
    %v913 = vld [vmem:[%s7 + $0x18] sm:$0xf]
    %v914 = vld [vmem:[%s7 + $0x1c] sm:$0xf]
    %v915 = vld [vmem:[%s7 + $0x20] sm:$0xf]
    %v916 = vld [vmem:[%s7 + $0x24] sm:$0xf]
    %v917 = vld [vmem:[%s7 + $0x28] sm:$0xf]
    %v918 = vld [vmem:[%s7 + $0x2c] sm:$0xf]
    %v919 = vld [vmem:[%s7 + $0x30] sm:$0xf]
    %v920 = vld [vmem:[%s7 + $0x34] sm:$0xf]
    %v921 = vld [vmem:[%s7 + $0x38] sm:$0xf]
    %v922 = vld [vmem:[%s7 + $0x3c] sm:$0xf]
    %v939 = vunpack.c.l.b16 %v907
    %v940 = vunpack.c.l.b16 %v908
    %v941 = vunpack.c.l.b16 %v909
    %v942 = vunpack.c.l.b16 %v910
    %v943 = vunpack.c.l.b16 %v911
    %v944 = vunpack.c.l.b16 %v912
    %v945 = vunpack.c.l.b16 %v913
    %v946 = vunpack.c.l.b16 %v914
    %v947 = vunpack.c.l.b16 %v915
    %v948 = vunpack.c.l.b16 %v916
    %v949 = vunpack.c.l.b16 %v917
    %v950 = vunpack.c.l.b16 %v918
    %v951 = vunpack.c.l.b16 %v919
    %v952 = vunpack.c.l.b16 %v920
    %v953 = vunpack.c.l.b16 %v921
    %v954 = vunpack.c.l.b16 %v922
    %v955 = vpack.c.b16 %v940, %v939
    %v956 = vpack.c.b16 %v942, %v941
    %v957 = vpack.c.b16 %v944, %v943
    %v958 = vpack.c.b16 %v946, %v945
    %v959 = vpack.c.b16 %v948, %v947
    %v960 = vpack.c.b16 %v950, %v949
    %v961 = vpack.c.b16 %v952, %v951
    %v962 = vpack.c.b16 %v954, %v953
    %971 = vmatprep.subr.bf16.mxu0 0
    %972 = vmatpush1.bf16.msra.mxu0 %v955
    %973 = vmatprep.subr.bf16.mxu0 0
    %974 = vmatpush1.bf16.msra.mxu0 %v956
    %975 = vmatprep.subr.bf16.mxu0 0
    %976 = vmatpush1.bf16.msra.mxu0 %v957
    %977 = vmatprep.subr.bf16.mxu0 0
    %978 = vmatpush1.bf16.msra.mxu0 %v958
    %979 = vmatprep.subr.bf16.mxu0 0
    %980 = vmatpush1.bf16.msra.mxu0 %v959
    %981 = vmatprep.subr.bf16.mxu0 0
    %982 = vmatpush1.bf16.msra.mxu0 %v960
    %983 = vmatprep.subr.bf16.mxu0 0
    %984 = vmatpush1.bf16.msra.mxu0 %v961
    %985 = vmatprep.subr.bf16.mxu0 0
    %986 = vmatpush1.bf16.msra.mxu0 %v962
    %987 = vmatprep.subr.bf16.mxu0 0
    %988 = vmatpush1.bf16.msra.mxu0 0
    %989 = vmatprep.subr.bf16.mxu0 0
    %990 = vmatpush1.bf16.msra.mxu0 0
    %991 = vmatprep.subr.bf16.mxu0 0
    %992 = vmatpush1.bf16.msra.mxu0 0
    %993 = vmatprep.subr.bf16.mxu0 0
    %994 = vmatpush1.bf16.msra.mxu0 0
    %995 = vmatprep.subr.bf16.mxu0 0
    %996 = vmatpush1.bf16.msra.mxu0 0
    %997 = vmatprep.subr.bf16.mxu0 0
    %998 = vmatpush1.bf16.msra.mxu0 0
    %999 = vmatprep.subr.bf16.mxu0 0
    %1000 = vmatpush1.bf16.msra.mxu0 0
    %1001 = vmatprep.subr.bf16.mxu0 0
    %1002 = vmatpush1.bf16.msra.mxu0 0
    %1003 = vmatprep.mubr.bf16.mxu0 0
    %1004 = vmatmul.mubr.bf16.gmra.mrb[0].mxu0 %v762
    %v1005 = vpop.f32.mrb[0].mxu0
    %v1006 = vadd.f32 0.0, %v1005
    %v1007 = vpop.f32.mrb[0].mxu0
    %v1008 = vpop.f32.mrb[0].mxu0
    %v1009 = vadd.f32 0.0, %v1008
    %v1010 = vpop.f32.mrb[0].mxu0
    %1011 = vmatprep.mubr.bf16.mxu0 0
    %1012 = vmatmul.mubr.bf16.gmra.mrb[0].mxu0 %v763
    %v1013 = vpop.f32.mrb[0].mxu0
    %v1014 = vadd.f32 0.0, %v1013
    %v1015 = vpop.f32.mrb[0].mxu0
    %v1016 = vpop.f32.mrb[0].mxu0
    %v1017 = vadd.f32 0.0, %v1016
    %v1018 = vpop.f32.mrb[0].mxu0
    %1019 = vmatprep.mubr.bf16.mxu0 0
    %1020 = vmatmul.mubr.bf16.gmra.mrb[0].mxu0 %v764
    %v1021 = vpop.f32.mrb[0].mxu0
    %v1022 = vadd.f32 0.0, %v1021
    %v1023 = vpop.f32.mrb[0].mxu0
    %v1024 = vpop.f32.mrb[0].mxu0
    %v1025 = vadd.f32 0.0, %v1024
    %v1026 = vpop.f32.mrb[0].mxu0
    %1027 = vmatprep.mubr.bf16.mxu0 0
    %1028 = vmatmul.mubr.bf16.gmra.mrb[0].mxu0 %v765
    %v1029 = vpop.f32.mrb[0].mxu0
    %v1030 = vadd.f32 0.0, %v1029
    %v1031 = vpop.f32.mrb[0].mxu0
    %v1032 = vpop.f32.mrb[0].mxu0
    %v1033 = vadd.f32 0.0, %v1032
    %v1034 = vpop.f32.mrb[0].mxu0
    %1035 = vmatprep.mubr.bf16.mxu0 0
    %1036 = vmatmul.mubr.bf16.gmra.mrb[0].mxu0 %v766
    %v1037 = vpop.f32.mrb[0].mxu0
    %v1038 = vadd.f32 0.0, %v1037
    %v1039 = vpop.f32.mrb[0].mxu0
    %v1040 = vpop.f32.mrb[0].mxu0
    %v1041 = vadd.f32 0.0, %v1040
    %v1042 = vpop.f32.mrb[0].mxu0
    %1043 = vmatprep.mubr.bf16.mxu0 0
    %1044 = vmatmul.mubr.bf16.gmra.mrb[0].mxu0 %v767
    %v1045 = vpop.f32.mrb[0].mxu0
    %v1046 = vadd.f32 0.0, %v1045
    %v1047 = vpop.f32.mrb[0].mxu0
    %v1048 = vpop.f32.mrb[0].mxu0
    %v1049 = vadd.f32 0.0, %v1048
    %v1050 = vpop.f32.mrb[0].mxu0
    %1051 = vmatprep.mubr.bf16.mxu0 0
    %1052 = vmatmul.mubr.bf16.gmra.mrb[0].mxu0 %v768
    %v1053 = vpop.f32.mrb[0].mxu0
    %v1054 = vadd.f32 0.0, %v1053
    %v1055 = vpop.f32.mrb[0].mxu0
    %v1056 = vpop.f32.mrb[0].mxu0
    %v1057 = vadd.f32 0.0, %v1056
    %v1058 = vpop.f32.mrb[0].mxu0
    %1059 = vmatprep.mubr.bf16.mxu0 0
    %1060 = vmatmul.mubr.bf16.gmra.mrb[0].mxu0 %v769
    %v1061 = vpop.f32.mrb[0].mxu0
    %v1062 = vadd.f32 0.0, %v1061
    %v1063 = vpop.f32.mrb[0].mxu0
    %v1064 = vpop.f32.mrb[0].mxu0
    %v1065 = vadd.f32 0.0, %v1064
    %v1066 = vpop.f32.mrb[0].mxu0
    %1067 = vdwg.mxu0
    %v1084 = vunpack.c.l.b16 %v891
    %v1085 = vunpack.c.l.b16 %v892
    %v1086 = vunpack.c.l.b16 %v893
    %v1087 = vunpack.c.l.b16 %v894
    %v1088 = vunpack.c.l.b16 %v895
    %v1089 = vunpack.c.l.b16 %v896
    %v1090 = vunpack.c.l.b16 %v897
    %v1091 = vunpack.c.l.b16 %v898
    %v1092 = vunpack.c.l.b16 %v899
    %v1093 = vunpack.c.l.b16 %v900
    %v1094 = vunpack.c.l.b16 %v901
    %v1095 = vunpack.c.l.b16 %v902
    %v1096 = vunpack.c.l.b16 %v903
    %v1097 = vunpack.c.l.b16 %v904
    %v1098 = vunpack.c.l.b16 %v905
    %v1099 = vunpack.c.l.b16 %v906
    %v1100 = vpack.c.b16 %v1085, %v1084
    %v1101 = vpack.c.b16 %v1087, %v1086
    %v1102 = vpack.c.b16 %v1089, %v1088
    %v1103 = vpack.c.b16 %v1091, %v1090
    %v1104 = vpack.c.b16 %v1093, %v1092
    %v1105 = vpack.c.b16 %v1095, %v1094
    %v1106 = vpack.c.b16 %v1097, %v1096
    %v1107 = vpack.c.b16 %v1099, %v1098
    %1116 = vmatprep.subr.bf16.mxu0 0
    %1117 = vmatpush1.bf16.msra.mxu0 %v1100
    %1118 = vmatprep.subr.bf16.mxu0 0
    %1119 = vmatpush1.bf16.msra.mxu0 %v1101
    %1120 = vmatprep.subr.bf16.mxu0 0
    %1121 = vmatpush1.bf16.msra.mxu0 %v1102
    %1122 = vmatprep.subr.bf16.mxu0 0
    %1123 = vmatpush1.bf16.msra.mxu0 %v1103
    %1124 = vmatprep.subr.bf16.mxu0 0
    %1125 = vmatpush1.bf16.msra.mxu0 %v1104
    %1126 = vmatprep.subr.bf16.mxu0 0
    %1127 = vmatpush1.bf16.msra.mxu0 %v1105
    %1128 = vmatprep.subr.bf16.mxu0 0
    %1129 = vmatpush1.bf16.msra.mxu0 %v1106
    %1130 = vmatprep.subr.bf16.mxu0 0
    %1131 = vmatpush1.bf16.msra.mxu0 %v1107
    %1132 = vmatprep.subr.bf16.mxu0 0
    %1133 = vmatpush1.bf16.msra.mxu0 0
    %1134 = vmatprep.subr.bf16.mxu0 0
    %1135 = vmatpush1.bf16.msra.mxu0 0
    %1136 = vmatprep.subr.bf16.mxu0 0
    %1137 = vmatpush1.bf16.msra.mxu0 0
    %1138 = vmatprep.subr.bf16.mxu0 0
    %1139 = vmatpush1.bf16.msra.mxu0 0
    %1140 = vmatprep.subr.bf16.mxu0 0
    %1141 = vmatpush1.bf16.msra.mxu0 0
    %1142 = vmatprep.subr.bf16.mxu0 0
    %1143 = vmatpush1.bf16.msra.mxu0 0
    %1144 = vmatprep.subr.bf16.mxu0 0
    %1145 = vmatpush1.bf16.msra.mxu0 0
    %1146 = vmatprep.subr.bf16.mxu0 0
    %1147 = vmatpush1.bf16.msra.mxu0 0
    %1148 = vmatprep.mubr.bf16.mxu0 0
    %1149 = vmatmul.mubr.bf16.gmra.mrb[0].mxu0 %v883
    %v1150 = vpop.f32.mrb[0].mxu0
    %v1151 = vadd.f32 %v1006, %v1150
    %v1152 = vpop.f32.mrb[0].mxu0
    %v1153 = vpop.f32.mrb[0].mxu0
    %v1154 = vadd.f32 %v1009, %v1153
    %v1155 = vpop.f32.mrb[0].mxu0
    %1156 = vmatprep.mubr.bf16.mxu0 0
    %1157 = vmatmul.mubr.bf16.gmra.mrb[0].mxu0 %v884
    %v1158 = vpop.f32.mrb[0].mxu0
    %v1159 = vadd.f32 %v1014, %v1158
    %v1160 = vpop.f32.mrb[0].mxu0
    %v1161 = vpop.f32.mrb[0].mxu0
    %v1162 = vadd.f32 %v1017, %v1161
    %v1163 = vpop.f32.mrb[0].mxu0
    %1164 = vmatprep.mubr.bf16.mxu0 0
    %1165 = vmatmul.mubr.bf16.gmra.mrb[0].mxu0 %v885
    %v1166 = vpop.f32.mrb[0].mxu0
    %v1167 = vadd.f32 %v1022, %v1166
    %v1168 = vpop.f32.mrb[0].mxu0
    %v1169 = vpop.f32.mrb[0].mxu0
    %v1170 = vadd.f32 %v1025, %v1169
    %v1171 = vpop.f32.mrb[0].mxu0
    %1172 = vmatprep.mubr.bf16.mxu0 0
    %1173 = vmatmul.mubr.bf16.gmra.mrb[0].mxu0 %v886
    %v1174 = vpop.f32.mrb[0].mxu0
    %v1175 = vadd.f32 %v1030, %v1174
    %v1176 = vpop.f32.mrb[0].mxu0
    %v1177 = vpop.f32.mrb[0].mxu0
    %v1178 = vadd.f32 %v1033, %v1177
    %v1179 = vpop.f32.mrb[0].mxu0
    %1180 = vmatprep.mubr.bf16.mxu0 0
    %1181 = vmatmul.mubr.bf16.gmra.mrb[0].mxu0 %v887
    %v1182 = vpop.f32.mrb[0].mxu0
    %v1183 = vadd.f32 %v1038, %v1182
    %v1184 = vpop.f32.mrb[0].mxu0
    %v1185 = vpop.f32.mrb[0].mxu0
    %v1186 = vadd.f32 %v1041, %v1185
    %v1187 = vpop.f32.mrb[0].mxu0
    %1188 = vmatprep.mubr.bf16.mxu0 0
    %1189 = vmatmul.mubr.bf16.gmra.mrb[0].mxu0 %v888
    %v1190 = vpop.f32.mrb[0].mxu0
    %v1191 = vadd.f32 %v1046, %v1190
    %v1192 = vpop.f32.mrb[0].mxu0
    %v1193 = vpop.f32.mrb[0].mxu0
    %v1194 = vadd.f32 %v1049, %v1193
    %v1195 = vpop.f32.mrb[0].mxu0
    %1196 = vmatprep.mubr.bf16.mxu0 0
    %1197 = vmatmul.mubr.bf16.gmra.mrb[0].mxu0 %v889
    %v1198 = vpop.f32.mrb[0].mxu0
    %v1199 = vadd.f32 %v1054, %v1198
    %v1200 = vpop.f32.mrb[0].mxu0
    %v1201 = vpop.f32.mrb[0].mxu0
    %v1202 = vadd.f32 %v1057, %v1201
    %v1203 = vpop.f32.mrb[0].mxu0
    %1204 = vmatprep.mubr.bf16.mxu0 0
    %1205 = vmatmul.mubr.bf16.gmra.mrb[0].mxu0 %v890
    %v1206 = vpop.f32.mrb[0].mxu0
    %v1207 = vadd.f32 %v1062, %v1206
    %v1208 = vpop.f32.mrb[0].mxu0
    %v1209 = vpop.f32.mrb[0].mxu0
    %v1210 = vadd.f32 %v1065, %v1209
    %v1211 = vpop.f32.mrb[0].mxu0
    %1212 = vdwg.mxu0
    %v1213 = vld [vmem:[%s8] sm:$0x1]
    %v1215 = vlaneseq
    %v1216 = vshrl.u32 %v1215, 7
    %v1217 = vsub.s32 0, %v1216
    %v1218 = vrot.slane %v1213, %v1217
    %v1220 = vadd.f32 %v1151, %v1218
    %v1221 = vadd.f32 %v1154, %v1218
    %v1222 = vadd.f32 %v1159, %v1218
    %v1223 = vadd.f32 %v1162, %v1218
    %v1224 = vadd.f32 %v1167, %v1218
    %v1225 = vadd.f32 %v1170, %v1218
    %v1226 = vadd.f32 %v1175, %v1218
    %v1227 = vadd.f32 %v1178, %v1218
    %v1228 = vadd.f32 %v1183, %v1218
    %v1229 = vadd.f32 %v1186, %v1218
    %v1230 = vadd.f32 %v1191, %v1218
    %v1231 = vadd.f32 %v1194, %v1218
    %v1232 = vadd.f32 %v1199, %v1218
    %v1233 = vadd.f32 %v1202, %v1218
    %v1234 = vadd.f32 %v1207, %v1218
    %v1235 = vadd.f32 %v1210, %v1218
    %v1236 = vmax.f32 %v1220, 0.0
    %v1237 = vmax.f32 %v1221, 0.0
    %v1238 = vmax.f32 %v1222, 0.0
    %v1239 = vmax.f32 %v1223, 0.0
    %v1240 = vmax.f32 %v1224, 0.0
    %v1241 = vmax.f32 %v1225, 0.0
    %v1242 = vmax.f32 %v1226, 0.0
    %v1243 = vmax.f32 %v1227, 0.0
    %v1244 = vmax.f32 %v1228, 0.0
    %v1245 = vmax.f32 %v1229, 0.0
    %v1246 = vmax.f32 %v1230, 0.0
    %v1247 = vmax.f32 %v1231, 0.0
    %v1248 = vmax.f32 %v1232, 0.0
    %v1249 = vmax.f32 %v1233, 0.0
    %v1250 = vmax.f32 %v1234, 0.0
    %v1251 = vmax.f32 %v1235, 0.0
    %v1252 = vpack.c.bf16 %v1237, %v1236
    %v1253 = vpack.c.bf16 %v1239, %v1238
    %v1254 = vpack.c.bf16 %v1241, %v1240
    %v1255 = vpack.c.bf16 %v1243, %v1242
    %v1256 = vpack.c.bf16 %v1245, %v1244
    %v1257 = vpack.c.bf16 %v1247, %v1246
    %v1258 = vpack.c.bf16 %v1249, %v1248
    %v1259 = vpack.c.bf16 %v1251, %v1250
    %1260 = vmatprep.subr.bf16.mxu0 0
    %1261 = vmatpush1.bf16.msra.mxu0 %v1252
    %1262 = vmatprep.subr.bf16.mxu0 0
    %1263 = vmatpush1.bf16.msra.mxu0 %v1253
    %1264 = vmatprep.subr.bf16.mxu0 0
    %1265 = vmatpush1.bf16.msra.mxu0 %v1254
    %1266 = vmatprep.subr.bf16.mxu0 0
    %1267 = vmatpush1.bf16.msra.mxu0 %v1255
    %1268 = vmatprep.subr.bf16.mxu0 0
    %1269 = vmatpush1.bf16.msra.mxu0 %v1256
    %1270 = vmatprep.subr.bf16.mxu0 0
    %1271 = vmatpush1.bf16.msra.mxu0 %v1257
    %1272 = vmatprep.subr.bf16.mxu0 0
    %1273 = vmatpush1.bf16.msra.mxu0 %v1258
    %1274 = vmatprep.subr.bf16.mxu0 0
    %1275 = vmatpush1.bf16.msra.mxu0 %v1259
    %1276 = vmatprep.subr.bf16.mxu0 0
    %1277 = vmatpush1.bf16.msra.mxu0 0
    %1278 = vmatprep.subr.bf16.mxu0 0
    %1279 = vmatpush1.bf16.msra.mxu0 0
    %1280 = vmatprep.subr.bf16.mxu0 0
    %1281 = vmatpush1.bf16.msra.mxu0 0
    %1282 = vmatprep.subr.bf16.mxu0 0
    %1283 = vmatpush1.bf16.msra.mxu0 0
    %1284 = vmatprep.subr.bf16.mxu0 0
    %1285 = vmatpush1.bf16.msra.mxu0 0
    %1286 = vmatprep.subr.bf16.mxu0 0
    %1287 = vmatpush1.bf16.msra.mxu0 0
    %1288 = vmatprep.subr.bf16.mxu0 0
    %1289 = vmatpush1.bf16.msra.mxu0 0
    %1290 = vmatprep.subr.bf16.mxu0 0
    %1291 = vmatpush1.bf16.msra.mxu0 0
    %1292 = vmatprep.mubr.bf16.mxu0 0
    %1293 = vmatmul.mubr.bf16.gmra.mrb[0].mxu0 %v136
    %v1294 = vpop.f32.mrb[0].mxu0
    %v1295 = vadd.f32 0.0, %v1294
    %v1296 = vpop.f32.mrb[0].mxu0
    %v1297 = vpop.f32.mrb[0].mxu0
    %v1298 = vadd.f32 0.0, %v1297
    %v1299 = vpop.f32.mrb[0].mxu0
    %1300 = vmatprep.mubr.bf16.mxu0 0
    %1301 = vmatmul.mubr.bf16.gmra.mrb[0].mxu0 %v137
    %v1302 = vpop.f32.mrb[0].mxu0
    %v1303 = vadd.f32 0.0, %v1302
    %v1304 = vpop.f32.mrb[0].mxu0
    %v1305 = vpop.f32.mrb[0].mxu0
    %v1306 = vadd.f32 0.0, %v1305
    %v1307 = vpop.f32.mrb[0].mxu0
    %1308 = vmatprep.mubr.bf16.mxu0 0
    %1309 = vmatmul.mubr.bf16.gmra.mrb[0].mxu0 %v138
    %v1310 = vpop.f32.mrb[0].mxu0
    %v1311 = vadd.f32 0.0, %v1310
    %v1312 = vpop.f32.mrb[0].mxu0
    %v1313 = vpop.f32.mrb[0].mxu0
    %v1314 = vadd.f32 0.0, %v1313
    %v1315 = vpop.f32.mrb[0].mxu0
    %1316 = vmatprep.mubr.bf16.mxu0 0
    %1317 = vmatmul.mubr.bf16.gmra.mrb[0].mxu0 %v139
    %v1318 = vpop.f32.mrb[0].mxu0
    %v1319 = vadd.f32 0.0, %v1318
    %v1320 = vpop.f32.mrb[0].mxu0
    %v1321 = vpop.f32.mrb[0].mxu0
    %v1322 = vadd.f32 0.0, %v1321
    %v1323 = vpop.f32.mrb[0].mxu0
    %1324 = vmatprep.mubr.bf16.mxu0 0
    %1325 = vmatmul.mubr.bf16.gmra.mrb[0].mxu0 %v140
    %v1326 = vpop.f32.mrb[0].mxu0
    %v1327 = vadd.f32 0.0, %v1326
    %v1328 = vpop.f32.mrb[0].mxu0
    %v1329 = vpop.f32.mrb[0].mxu0
    %v1330 = vadd.f32 0.0, %v1329
    %v1331 = vpop.f32.mrb[0].mxu0
    %1332 = vmatprep.mubr.bf16.mxu0 0
    %1333 = vmatmul.mubr.bf16.gmra.mrb[0].mxu0 %v141
    %v1334 = vpop.f32.mrb[0].mxu0
    %v1335 = vadd.f32 0.0, %v1334
    %v1336 = vpop.f32.mrb[0].mxu0
    %v1337 = vpop.f32.mrb[0].mxu0
    %v1338 = vadd.f32 0.0, %v1337
    %v1339 = vpop.f32.mrb[0].mxu0
    %1340 = vmatprep.mubr.bf16.mxu0 0
    %1341 = vmatmul.mubr.bf16.gmra.mrb[0].mxu0 %v142
    %v1342 = vpop.f32.mrb[0].mxu0
    %v1343 = vadd.f32 0.0, %v1342
    %v1344 = vpop.f32.mrb[0].mxu0
    %v1345 = vpop.f32.mrb[0].mxu0
    %v1346 = vadd.f32 0.0, %v1345
    %v1347 = vpop.f32.mrb[0].mxu0
    %1348 = vmatprep.mubr.bf16.mxu0 0
    %1349 = vmatmul.mubr.bf16.gmra.mrb[0].mxu0 %v143
    %v1350 = vpop.f32.mrb[0].mxu0
    %v1351 = vadd.f32 0.0, %v1350
    %v1352 = vpop.f32.mrb[0].mxu0
    %v1353 = vpop.f32.mrb[0].mxu0
    %v1354 = vadd.f32 0.0, %v1353
    %v1355 = vpop.f32.mrb[0].mxu0
    %1356 = vdwg.mxu0
    %v1357 = vmul.f32 %v1295, %v300
    %v1358 = vmul.f32 %v1298, %v305
    %v1359 = vmul.f32 %v1303, %v310
    %v1360 = vmul.f32 %v1306, %v315
    %v1361 = vmul.f32 %v1311, %v320
    %v1362 = vmul.f32 %v1314, %v325
    %v1363 = vmul.f32 %v1319, %v330
    %v1364 = vmul.f32 %v1322, %v335
    %v1365 = vmul.f32 %v1327, %v340
    %v1366 = vmul.f32 %v1330, %v345
    %v1367 = vmul.f32 %v1335, %v350
    %v1368 = vmul.f32 %v1338, %v355
    %v1369 = vmul.f32 %v1343, %v360
    %v1370 = vmul.f32 %v1346, %v365
    %v1371 = vmul.f32 %v1351, %v370
    %v1372 = vmul.f32 %v1354, %v375
    %v1373 = vpack.c.bf16 %v1358, %v1357
    %v1374 = vpack.c.bf16 %v1360, %v1359
    %v1375 = vpack.c.bf16 %v1362, %v1361
    %v1376 = vpack.c.bf16 %v1364, %v1363
    %v1377 = vpack.c.bf16 %v1366, %v1365
    %v1378 = vpack.c.bf16 %v1368, %v1367
    %v1379 = vpack.c.bf16 %v1370, %v1369
    %v1380 = vpack.c.bf16 %v1372, %v1371
    %v1381 = vld [vmem:[%s9] sm:$0xf]
    %v1382 = vld [vmem:[%s9 + $0x4] sm:$0xf]
    %v1383 = vld [vmem:[%s9 + $0x8] sm:$0xf]
    %v1384 = vld [vmem:[%s9 + $0xc] sm:$0xf]
    %v1385 = vld [vmem:[%s9 + $0x10] sm:$0xf]
    %v1386 = vld [vmem:[%s9 + $0x14] sm:$0xf]
    %v1387 = vld [vmem:[%s9 + $0x18] sm:$0xf]
    %v1388 = vld [vmem:[%s9 + $0x1c] sm:$0xf]
    %v1389 = vld [vmem:[%s9 + $0x20] sm:$0xf]
    %v1390 = vld [vmem:[%s9 + $0x24] sm:$0xf]
    %v1391 = vld [vmem:[%s9 + $0x28] sm:$0xf]
    %v1392 = vld [vmem:[%s9 + $0x2c] sm:$0xf]
    %v1393 = vld [vmem:[%s9 + $0x30] sm:$0xf]
    %v1394 = vld [vmem:[%s9 + $0x34] sm:$0xf]
    %v1395 = vld [vmem:[%s9 + $0x38] sm:$0xf]
    %v1396 = vld [vmem:[%s9 + $0x3c] sm:$0xf]
    %v1397 = vld [vmem:[#allocation2] sm:$0xf]
    %v1398 = vld [vmem:[#allocation2 + $0x4] sm:$0xf]
    %v1399 = vld [vmem:[#allocation2 + $0x8] sm:$0xf]
    %v1400 = vld [vmem:[#allocation2 + $0xc] sm:$0xf]
    %v1401 = vld [vmem:[#allocation2 + $0x10] sm:$0xf]
    %v1402 = vld [vmem:[#allocation2 + $0x14] sm:$0xf]
    %v1403 = vld [vmem:[#allocation2 + $0x18] sm:$0xf]
    %v1404 = vld [vmem:[#allocation2 + $0x1c] sm:$0xf]
    %v1405 = vld [vmem:[#allocation2 + $0x20] sm:$0xf]
    %v1406 = vld [vmem:[#allocation2 + $0x24] sm:$0xf]
    %v1407 = vld [vmem:[#allocation2 + $0x28] sm:$0xf]
    %v1408 = vld [vmem:[#allocation2 + $0x2c] sm:$0xf]
    %v1409 = vld [vmem:[#allocation2 + $0x30] sm:$0xf]
    %v1410 = vld [vmem:[#allocation2 + $0x34] sm:$0xf]
    %v1411 = vld [vmem:[#allocation2 + $0x38] sm:$0xf]
    %v1412 = vld [vmem:[#allocation2 + $0x3c] sm:$0xf]
    %v1429 = vunpack.c.l.b16 %v1397
    %v1430 = vunpack.c.l.b16 %v1398
    %v1431 = vunpack.c.l.b16 %v1399
    %v1432 = vunpack.c.l.b16 %v1400
    %v1433 = vunpack.c.l.b16 %v1401
    %v1434 = vunpack.c.l.b16 %v1402
    %v1435 = vunpack.c.l.b16 %v1403
    %v1436 = vunpack.c.l.b16 %v1404
    %v1437 = vunpack.c.l.b16 %v1405
    %v1438 = vunpack.c.l.b16 %v1406
    %v1439 = vunpack.c.l.b16 %v1407
    %v1440 = vunpack.c.l.b16 %v1408
    %v1441 = vunpack.c.l.b16 %v1409
    %v1442 = vunpack.c.l.b16 %v1410
    %v1443 = vunpack.c.l.b16 %v1411
    %v1444 = vunpack.c.l.b16 %v1412
    %v1445 = vpack.c.b16 %v1430, %v1429
    %v1446 = vpack.c.b16 %v1432, %v1431
    %v1447 = vpack.c.b16 %v1434, %v1433
    %v1448 = vpack.c.b16 %v1436, %v1435
    %v1449 = vpack.c.b16 %v1438, %v1437
    %v1450 = vpack.c.b16 %v1440, %v1439
    %v1451 = vpack.c.b16 %v1442, %v1441
    %v1452 = vpack.c.b16 %v1444, %v1443
    %1461 = vmatprep.subr.bf16.mxu0 0
    %1462 = vmatpush1.bf16.msra.mxu0 %v1445
    %1463 = vmatprep.subr.bf16.mxu0 0
    %1464 = vmatpush1.bf16.msra.mxu0 %v1446
    %1465 = vmatprep.subr.bf16.mxu0 0
    %1466 = vmatpush1.bf16.msra.mxu0 %v1447
    %1467 = vmatprep.subr.bf16.mxu0 0
    %1468 = vmatpush1.bf16.msra.mxu0 %v1448
    %1469 = vmatprep.subr.bf16.mxu0 0
    %1470 = vmatpush1.bf16.msra.mxu0 %v1449
    %1471 = vmatprep.subr.bf16.mxu0 0
    %1472 = vmatpush1.bf16.msra.mxu0 %v1450
    %1473 = vmatprep.subr.bf16.mxu0 0
    %1474 = vmatpush1.bf16.msra.mxu0 %v1451
    %1475 = vmatprep.subr.bf16.mxu0 0
    %1476 = vmatpush1.bf16.msra.mxu0 %v1452
    %1477 = vmatprep.subr.bf16.mxu0 0
    %1478 = vmatpush1.bf16.msra.mxu0 0
    %1479 = vmatprep.subr.bf16.mxu0 0
    %1480 = vmatpush1.bf16.msra.mxu0 0
    %1481 = vmatprep.subr.bf16.mxu0 0
    %1482 = vmatpush1.bf16.msra.mxu0 0
    %1483 = vmatprep.subr.bf16.mxu0 0
    %1484 = vmatpush1.bf16.msra.mxu0 0
    %1485 = vmatprep.subr.bf16.mxu0 0
    %1486 = vmatpush1.bf16.msra.mxu0 0
    %1487 = vmatprep.subr.bf16.mxu0 0
    %1488 = vmatpush1.bf16.msra.mxu0 0
    %1489 = vmatprep.subr.bf16.mxu0 0
    %1490 = vmatpush1.bf16.msra.mxu0 0
    %1491 = vmatprep.subr.bf16.mxu0 0
    %1492 = vmatpush1.bf16.msra.mxu0 0
    %1493 = vmatprep.mubr.bf16.mxu0 0
    %1494 = vmatmul.mubr.bf16.gmra.mrb[0].mxu0 %v1252
    %v1495 = vpop.f32.mrb[0].mxu0
    %v1496 = vadd.f32 0.0, %v1495
    %v1497 = vpop.f32.mrb[0].mxu0
    %v1498 = vpop.f32.mrb[0].mxu0
    %v1499 = vadd.f32 0.0, %v1498
    %v1500 = vpop.f32.mrb[0].mxu0
    %1501 = vmatprep.mubr.bf16.mxu0 0
    %1502 = vmatmul.mubr.bf16.gmra.mrb[0].mxu0 %v1253
    %v1503 = vpop.f32.mrb[0].mxu0
    %v1504 = vadd.f32 0.0, %v1503
    %v1505 = vpop.f32.mrb[0].mxu0
    %v1506 = vpop.f32.mrb[0].mxu0
    %v1507 = vadd.f32 0.0, %v1506
    %v1508 = vpop.f32.mrb[0].mxu0
    %1509 = vmatprep.mubr.bf16.mxu0 0
    %1510 = vmatmul.mubr.bf16.gmra.mrb[0].mxu0 %v1254
    %v1511 = vpop.f32.mrb[0].mxu0
    %v1512 = vadd.f32 0.0, %v1511
    %v1513 = vpop.f32.mrb[0].mxu0
    %v1514 = vpop.f32.mrb[0].mxu0
    %v1515 = vadd.f32 0.0, %v1514
    %v1516 = vpop.f32.mrb[0].mxu0
    %1517 = vmatprep.mubr.bf16.mxu0 0
    %1518 = vmatmul.mubr.bf16.gmra.mrb[0].mxu0 %v1255
    %v1519 = vpop.f32.mrb[0].mxu0
    %v1520 = vadd.f32 0.0, %v1519
    %v1521 = vpop.f32.mrb[0].mxu0
    %v1522 = vpop.f32.mrb[0].mxu0
    %v1523 = vadd.f32 0.0, %v1522
    %v1524 = vpop.f32.mrb[0].mxu0
    %1525 = vmatprep.mubr.bf16.mxu0 0
    %1526 = vmatmul.mubr.bf16.gmra.mrb[0].mxu0 %v1256
    %v1527 = vpop.f32.mrb[0].mxu0
    %v1528 = vadd.f32 0.0, %v1527
    %v1529 = vpop.f32.mrb[0].mxu0
    %v1530 = vpop.f32.mrb[0].mxu0
    %v1531 = vadd.f32 0.0, %v1530
    %v1532 = vpop.f32.mrb[0].mxu0
    %1533 = vmatprep.mubr.bf16.mxu0 0
    %1534 = vmatmul.mubr.bf16.gmra.mrb[0].mxu0 %v1257
    %v1535 = vpop.f32.mrb[0].mxu0
    %v1536 = vadd.f32 0.0, %v1535
    %v1537 = vpop.f32.mrb[0].mxu0
    %v1538 = vpop.f32.mrb[0].mxu0
    %v1539 = vadd.f32 0.0, %v1538
    %v1540 = vpop.f32.mrb[0].mxu0
    %1541 = vmatprep.mubr.bf16.mxu0 0
    %1542 = vmatmul.mubr.bf16.gmra.mrb[0].mxu0 %v1258
    %v1543 = vpop.f32.mrb[0].mxu0
    %v1544 = vadd.f32 0.0, %v1543
    %v1545 = vpop.f32.mrb[0].mxu0
    %v1546 = vpop.f32.mrb[0].mxu0
    %v1547 = vadd.f32 0.0, %v1546
    %v1548 = vpop.f32.mrb[0].mxu0
    %1549 = vmatprep.mubr.bf16.mxu0 0
    %1550 = vmatmul.mubr.bf16.gmra.mrb[0].mxu0 %v1259
    %v1551 = vpop.f32.mrb[0].mxu0
    %v1552 = vadd.f32 0.0, %v1551
    %v1553 = vpop.f32.mrb[0].mxu0
    %v1554 = vpop.f32.mrb[0].mxu0
    %v1555 = vadd.f32 0.0, %v1554
    %v1556 = vpop.f32.mrb[0].mxu0
    %1557 = vdwg.mxu0
    %v1574 = vunpack.c.l.b16 %v1381
    %v1575 = vunpack.c.l.b16 %v1382
    %v1576 = vunpack.c.l.b16 %v1383
    %v1577 = vunpack.c.l.b16 %v1384
    %v1578 = vunpack.c.l.b16 %v1385
    %v1579 = vunpack.c.l.b16 %v1386
    %v1580 = vunpack.c.l.b16 %v1387
    %v1581 = vunpack.c.l.b16 %v1388
    %v1582 = vunpack.c.l.b16 %v1389
    %v1583 = vunpack.c.l.b16 %v1390
    %v1584 = vunpack.c.l.b16 %v1391
    %v1585 = vunpack.c.l.b16 %v1392
    %v1586 = vunpack.c.l.b16 %v1393
    %v1587 = vunpack.c.l.b16 %v1394
    %v1588 = vunpack.c.l.b16 %v1395
    %v1589 = vunpack.c.l.b16 %v1396
    %v1590 = vpack.c.b16 %v1575, %v1574
    %v1591 = vpack.c.b16 %v1577, %v1576
    %v1592 = vpack.c.b16 %v1579, %v1578
    %v1593 = vpack.c.b16 %v1581, %v1580
    %v1594 = vpack.c.b16 %v1583, %v1582
    %v1595 = vpack.c.b16 %v1585, %v1584
    %v1596 = vpack.c.b16 %v1587, %v1586
    %v1597 = vpack.c.b16 %v1589, %v1588
    %1606 = vmatprep.subr.bf16.mxu0 0
    %1607 = vmatpush1.bf16.msra.mxu0 %v1590
    %1608 = vmatprep.subr.bf16.mxu0 0
    %1609 = vmatpush1.bf16.msra.mxu0 %v1591
    %1610 = vmatprep.subr.bf16.mxu0 0
    %1611 = vmatpush1.bf16.msra.mxu0 %v1592
    %1612 = vmatprep.subr.bf16.mxu0 0
    %1613 = vmatpush1.bf16.msra.mxu0 %v1593
    %1614 = vmatprep.subr.bf16.mxu0 0
    %1615 = vmatpush1.bf16.msra.mxu0 %v1594
    %1616 = vmatprep.subr.bf16.mxu0 0
    %1617 = vmatpush1.bf16.msra.mxu0 %v1595
    %1618 = vmatprep.subr.bf16.mxu0 0
    %1619 = vmatpush1.bf16.msra.mxu0 %v1596
    %1620 = vmatprep.subr.bf16.mxu0 0
    %1621 = vmatpush1.bf16.msra.mxu0 %v1597
    %1622 = vmatprep.subr.bf16.mxu0 0
    %1623 = vmatpush1.bf16.msra.mxu0 0
    %1624 = vmatprep.subr.bf16.mxu0 0
    %1625 = vmatpush1.bf16.msra.mxu0 0
    %1626 = vmatprep.subr.bf16.mxu0 0
    %1627 = vmatpush1.bf16.msra.mxu0 0
    %1628 = vmatprep.subr.bf16.mxu0 0
    %1629 = vmatpush1.bf16.msra.mxu0 0
    %1630 = vmatprep.subr.bf16.mxu0 0
    %1631 = vmatpush1.bf16.msra.mxu0 0
    %1632 = vmatprep.subr.bf16.mxu0 0
    %1633 = vmatpush1.bf16.msra.mxu0 0
    %1634 = vmatprep.subr.bf16.mxu0 0
    %1635 = vmatpush1.bf16.msra.mxu0 0
    %1636 = vmatprep.subr.bf16.mxu0 0
    %1637 = vmatpush1.bf16.msra.mxu0 0
    %1638 = vmatprep.mubr.bf16.mxu0 0
    %1639 = vmatmul.mubr.bf16.gmra.mrb[0].mxu0 %v1373
    %v1640 = vpop.f32.mrb[0].mxu0
    %v1641 = vadd.f32 %v1496, %v1640
    %v1642 = vpop.f32.mrb[0].mxu0
    %v1643 = vpop.f32.mrb[0].mxu0
    %v1644 = vadd.f32 %v1499, %v1643
    %v1645 = vpop.f32.mrb[0].mxu0
    %1646 = vmatprep.mubr.bf16.mxu0 0
    %1647 = vmatmul.mubr.bf16.gmra.mrb[0].mxu0 %v1374
    %v1648 = vpop.f32.mrb[0].mxu0
    %v1649 = vadd.f32 %v1504, %v1648
    %v1650 = vpop.f32.mrb[0].mxu0
    %v1651 = vpop.f32.mrb[0].mxu0
    %v1652 = vadd.f32 %v1507, %v1651
    %v1653 = vpop.f32.mrb[0].mxu0
    %1654 = vmatprep.mubr.bf16.mxu0 0
    %1655 = vmatmul.mubr.bf16.gmra.mrb[0].mxu0 %v1375
    %v1656 = vpop.f32.mrb[0].mxu0
    %v1657 = vadd.f32 %v1512, %v1656
    %v1658 = vpop.f32.mrb[0].mxu0
    %v1659 = vpop.f32.mrb[0].mxu0
    %v1660 = vadd.f32 %v1515, %v1659
    %v1661 = vpop.f32.mrb[0].mxu0
    %1662 = vmatprep.mubr.bf16.mxu0 0
    %1663 = vmatmul.mubr.bf16.gmra.mrb[0].mxu0 %v1376
    %v1664 = vpop.f32.mrb[0].mxu0
    %v1665 = vadd.f32 %v1520, %v1664
    %v1666 = vpop.f32.mrb[0].mxu0
    %v1667 = vpop.f32.mrb[0].mxu0
    %v1668 = vadd.f32 %v1523, %v1667
    %v1669 = vpop.f32.mrb[0].mxu0
    %1670 = vmatprep.mubr.bf16.mxu0 0
    %1671 = vmatmul.mubr.bf16.gmra.mrb[0].mxu0 %v1377
    %v1672 = vpop.f32.mrb[0].mxu0
    %v1673 = vadd.f32 %v1528, %v1672
    %v1674 = vpop.f32.mrb[0].mxu0
    %v1675 = vpop.f32.mrb[0].mxu0
    %v1676 = vadd.f32 %v1531, %v1675
    %v1677 = vpop.f32.mrb[0].mxu0
    %1678 = vmatprep.mubr.bf16.mxu0 0
    %1679 = vmatmul.mubr.bf16.gmra.mrb[0].mxu0 %v1378
    %v1680 = vpop.f32.mrb[0].mxu0
    %v1681 = vadd.f32 %v1536, %v1680
    %v1682 = vpop.f32.mrb[0].mxu0
    %v1683 = vpop.f32.mrb[0].mxu0
    %v1684 = vadd.f32 %v1539, %v1683
    %v1685 = vpop.f32.mrb[0].mxu0
    %1686 = vmatprep.mubr.bf16.mxu0 0
    %1687 = vmatmul.mubr.bf16.gmra.mrb[0].mxu0 %v1379
    %v1688 = vpop.f32.mrb[0].mxu0
    %v1689 = vadd.f32 %v1544, %v1688
    %v1690 = vpop.f32.mrb[0].mxu0
    %v1691 = vpop.f32.mrb[0].mxu0
    %v1692 = vadd.f32 %v1547, %v1691
    %v1693 = vpop.f32.mrb[0].mxu0
    %1694 = vmatprep.mubr.bf16.mxu0 0
    %1695 = vmatmul.mubr.bf16.gmra.mrb[0].mxu0 %v1380
    %v1696 = vpop.f32.mrb[0].mxu0
    %v1697 = vadd.f32 %v1552, %v1696
    %v1698 = vpop.f32.mrb[0].mxu0
    %v1699 = vpop.f32.mrb[0].mxu0
    %v1700 = vadd.f32 %v1555, %v1699
    %v1701 = vpop.f32.mrb[0].mxu0
    %1702 = vdwg.mxu0
    %v1703 = vld [vmem:[%s11] sm:$0x1]
    %v1705 = vlaneseq
    %v1706 = vshrl.u32 %v1705, 7
    %v1707 = vsub.s32 0, %v1706
    %v1708 = vrot.slane %v1703, %v1707
    %v1710 = vadd.f32 %v1641, %v1708
    %v1711 = vadd.f32 %v1644, %v1708
    %v1712 = vadd.f32 %v1649, %v1708
    %v1713 = vadd.f32 %v1652, %v1708
    %v1714 = vadd.f32 %v1657, %v1708
    %v1715 = vadd.f32 %v1660, %v1708
    %v1716 = vadd.f32 %v1665, %v1708
    %v1717 = vadd.f32 %v1668, %v1708
    %v1718 = vadd.f32 %v1673, %v1708
    %v1719 = vadd.f32 %v1676, %v1708
    %v1720 = vadd.f32 %v1681, %v1708
    %v1721 = vadd.f32 %v1684, %v1708
    %v1722 = vadd.f32 %v1689, %v1708
    %v1723 = vadd.f32 %v1692, %v1708
    %v1724 = vadd.f32 %v1697, %v1708
    %v1725 = vadd.f32 %v1700, %v1708
    %1726 = vst [vmem:[%s12] sm:$0xff] %v1710
    %1727 = vst [vmem:[%s12 + $0x8] sm:$0xff] %v1711
    %1728 = vst [vmem:[%s12 + $0x10] sm:$0xff] %v1712
    %1729 = vst [vmem:[%s12 + $0x18] sm:$0xff] %v1713
    %1730 = vst [vmem:[%s12 + $0x20] sm:$0xff] %v1714
    %1731 = vst [vmem:[%s12 + $0x28] sm:$0xff] %v1715
    %1732 = vst [vmem:[%s12 + $0x30] sm:$0xff] %v1716
    %1733 = vst [vmem:[%s12 + $0x38] sm:$0xff] %v1717
    %1734 = vst [vmem:[%s12 + $0x40] sm:$0xff] %v1718
    %1735 = vst [vmem:[%s12 + $0x48] sm:$0xff] %v1719
    %1736 = vst [vmem:[%s12 + $0x50] sm:$0xff] %v1720
    %1737 = vst [vmem:[%s12 + $0x58] sm:$0xff] %v1721
    %1738 = vst [vmem:[%s12 + $0x60] sm:$0xff] %v1722
    %1739 = vst [vmem:[%s12 + $0x68] sm:$0xff] %v1723
    %1740 = vst [vmem:[%s12 + $0x70] sm:$0xff] %v1724
    %1741 = vst [vmem:[%s12 + $0x78] sm:$0xff] %v1725
    // Predicated region
    $region54: #{graphsage_forward.1} parent=1 // pred_check
      _
    $region55: #{graphsage_forward.1} parent=1 // pred_check_branch
      %1743 = sbr.rel (0) target = $region57
    $region56: #{graphsage_forward.1} parent=1 // pred_region
      _
    $region57: #{graphsage_forward.1} parent=1 // pred_fallthru
      _
    // Predicated region
    $region58: #{graphsage_forward.1} parent=1 // pred_check
      _
    $region59: #{graphsage_forward.1} parent=1 // pred_check_branch
      %1745 = sbr.rel (0) target = $region61
    $region60: #{graphsage_forward.1} parent=1 // pred_region
      _
    $region61: #{graphsage_forward.1} parent=1 // pred_fallthru
      _
    %1746 = vsyncpa [#allocation3], 1

</llo_original>
